<compile_context>
chip_gen: v5e
topology: v5e:2x2
jax: 0.10.0
libtpu: 0.0.40
codegen_flags: <defaults>
</compile_context>

<pallas_src>
import functools
import math

import numpy as np
import jax
import jax.numpy as jnp
from jax import lax
from jax.experimental import pallas as pl
from jax.experimental.pallas import tpu as pltpu


def _round_up(x, m):
    return ((x + m - 1) // m) * m


# ----------------------------- Pallas kernel ------------------------------ #

def _deconv_gru_kernel(xflat_ref, hflat_ref, w1_ref, w2_ref, b1_ref, out_ref,
                       *, H, W, Ch, K):
    """Fused DeconvGRU cell, one batch element per grid step.

    xflat_ref : (H+2P, CL)      spatially padded [x, h] flattened as (W+2P)*C
                                along lanes (zero-padded up to CL=mult of 128)
    hflat_ref : (H, W*Ch)       prev hidden state, lane-dense
    w1_ref    : (K*CL, 3*W*Ch)  banded fused weight: update | reset | out(x-part)
    w2_ref    : (K*W*Ch, W*Ch)  banded out-gate weight for the h*reset part
    b1_ref    : (1, 3*W*Ch)     fused biases (tiled over W)
    out_ref   : (H, W*Ch)       new hidden state, lane-dense
    """
    f32 = jnp.float32
    P = (K - 1) // 2
    WC = W * Ch

    # ---- phase 1: one banded matmul for update | reset | out-gate(x part) ----
    # LHS rows are K vertically-shifted copies of the padded input row, so the
    # whole 3x3 conv (all gates, all pixels in a row) is a single MXU call.
    lhs1 = jnp.concatenate([xflat_ref[dy:dy + H, :] for dy in range(K)],
                           axis=1)                                   # (H, K*CL)
    g = jnp.dot(lhs1, w1_ref[...], preferred_element_type=f32) + b1_ref[...]
    update = jax.nn.sigmoid(g[:, :WC])                               # (H, W*Ch)
    reset = jax.nn.sigmoid(g[:, WC:2 * WC])                          # (H, W*Ch)
    acc_o = g[:, 2 * WC:]                                            # (H, W*Ch)

    h_prev = hflat_ref[...]                                          # (H, W*Ch)
    hr = h_prev * reset

    # ---- phase 2: out-gate contribution of (h * reset), banded matmul --------
    # Vertical taps handled by zero-filled row shifts (no padded scratch);
    # horizontal taps + channel mixing live inside the banded weight.
    blocks = []
    for dy in range(K):
        off = dy - P
        if off < 0:
            blk = jnp.concatenate(
                [jnp.zeros((-off, WC), f32), hr[:H + off, :]], axis=0)
        elif off > 0:
            blk = jnp.concatenate(
                [hr[off:, :], jnp.zeros((off, WC), f32)], axis=0)
        else:
            blk = hr
        blocks.append(blk)
    lhs2 = jnp.concatenate(blocks, axis=1)                           # (H, K*W*Ch)
    acc_o = acc_o + jnp.dot(lhs2, w2_ref[...], preferred_element_type=f32)

    # leaky_relu(negative_slope=0.2)
    out_in = jnp.where(acc_o >= 0.0, acc_o, 0.2 * acc_o)

    new_state = h_prev * (1.0 - update) + out_in * update            # (H, W*Ch)
    out_ref[...] = new_state.astype(out_ref.dtype)


# ----------------------- weight re-packing (run once) ---------------------- #

def _convT_weight_to_conv(wt):
    """PyTorch ConvTranspose2d weight (Cin, Cout, kH, kW), stride=1, pad=1
    -> equivalent conv weight (kH, kW, Cin, Cout) with spatial flip."""
    return jnp.transpose(jnp.flip(wt, axis=(2, 3)), (2, 3, 0, 1))


def prepare_gate_weights(params, H, W, Ci, Ch, K=3):
    """Build the banded (Toeplitz-in-W) fused weights used by the kernel."""
    C = Ci + Ch
    P = (K - 1) // 2
    WC = W * Ch
    CL = _round_up((W + 2 * P) * C, 128)

    wu = _convT_weight_to_conv(params["w_update"]).astype(jnp.float32)
    wr = _convT_weight_to_conv(params["w_reset"]).astype(jnp.float32)
    wo = _convT_weight_to_conv(params["w_out"]).astype(jnp.float32)
    # out-gate sees cat([x, h*reset]): x-part goes in the fused phase-1 weight
    # (hidden rows zeroed), h*reset part goes in the phase-2 weight.
    wo_x = wo.at[:, :, Ci:, :].set(0.0)
    wstack = jnp.stack([wu, wr, wo_x], axis=0)          # (3, K, K, C, Ch)

    # phase-1 band: row (dy, jj, ci) -> col (gate, j, co), nonzero iff jj == j+dx
    jj = np.arange(W + 2 * P)[:, None, None]
    j = np.arange(W)[None, :, None]
    dx = np.arange(K)[None, None, :]
    ind1 = jnp.asarray((jj == j + dx).astype(np.float32))           # (W+2P, W, K)
    w1 = jnp.einsum('Jjd,gydcO->yJcgjO', ind1, wstack)   # (K, W+2P, C, 3, W, Ch)
    w1 = w1.reshape(K, (W + 2 * P) * C, 3 * WC)
    w1 = jnp.pad(w1, ((0, 0), (0, CL - (W + 2 * P) * C), (0, 0)))
    w1 = w1.reshape(K * CL, 3 * WC)

    # phase-2 band: row (dy, jh, ch) -> col (j, co), nonzero iff jh == j+dx-P
    jh = np.arange(W)[:, None, None]
    ind2 = jnp.asarray((jh == j + dx - P).astype(np.float32))       # (W, W, K)
    w2h = wo[:, :, Ci:, :]                                          # (K, K, Ch, Ch)
    w2 = jnp.einsum('Jjd,ydcO->yJcjO', ind2, w2h)        # (K, W, Ch, W, Ch)
    w2 = w2.reshape(K * WC, WC)

    b1 = jnp.concatenate([jnp.tile(params["b_update"].astype(jnp.float32), W),
                          jnp.tile(params["b_reset"].astype(jnp.float32), W),
                          jnp.tile(params["b_out"].astype(jnp.float32), W)])
    b1 = b1.reshape(1, 3 * WC)

    return {"w1": w1, "w2": w2, "b1": b1}


# ------------------------------ JAX wrapper -------------------------------- #

@jax.jit
def deconv_gru_cell(input_, prev_state, gate_w):
    """input_: (B, Ci, H, W) NCHW, prev_state: (B, Ch, H, W) NCHW.
    gate_w: output of prepare_gate_weights.  Returns new_state (B, Ch, H, W)."""
    # TODO(synk): the `input_ is None` branch of the PyTorch forward (state-only
    # path) is not implemented; this kernel covers the standard concat path.
    K = 3
    B, Ci, H, W = input_.shape
    _, Ch, _, _ = prev_state.shape
    C = Ci + Ch
    P = (K - 1) // 2
    WC = W * Ch
    CL = _round_up((W + 2 * P) * C, 128)

    x = jnp.transpose(input_, (0, 2, 3, 1)).astype(jnp.float32)       # NHWC
    h = jnp.transpose(prev_state, (0, 2, 3, 1)).astype(jnp.float32)   # NHWC
    stacked = jnp.concatenate([x, h], axis=-1)                        # (B,H,W,C)
    sp = jnp.pad(stacked, ((0, 0), (P, P), (P, P), (0, 0)))           # (B,H+2P,W+2P,C)
    xflat = sp.reshape(B, H + 2 * P, (W + 2 * P) * C)
    xflat = jnp.pad(xflat, ((0, 0), (0, 0), (0, CL - (W + 2 * P) * C)))
    hflat = h.reshape(B, H, WC)

    kern = functools.partial(_deconv_gru_kernel, H=H, W=W, Ch=Ch, K=K)

    flops = B * (2 * H * (K * CL) * (3 * WC) + 2 * H * (K * WC) * WC)
    bytes_accessed = 4 * (B * (H + 2 * P) * CL + B * H * WC
                          + K * CL * 3 * WC + K * WC * WC + 3 * WC
                          + B * H * WC)
    cost = pl.CostEstimate(flops=flops,
                           transcendentals=2 * B * H * WC,
                           bytes_accessed=bytes_accessed)

    out = pl.pallas_call(
        kern,
        out_shape=jax.ShapeDtypeStruct((B, H, WC), jnp.float32),
        grid=(B,),
        in_specs=[
            pl.BlockSpec((None, H + 2 * P, CL), lambda b: (b, 0, 0)),
            pl.BlockSpec((None, H, WC), lambda b: (b, 0, 0)),
            pl.BlockSpec((K * CL, 3 * WC), lambda b: (0, 0)),
            pl.BlockSpec((K * WC, WC), lambda b: (0, 0)),
            pl.BlockSpec((1, 3 * WC), lambda b: (0, 0)),
        ],
        out_specs=pl.BlockSpec((None, H, WC), lambda b: (b, 0, 0)),
        compiler_params=pltpu.CompilerParams(
            dimension_semantics=("parallel",),
            vmem_limit_bytes=32 * 1024 * 1024),
        cost_estimate=cost,
    )(xflat, hflat, gate_w["w1"], gate_w["w2"], gate_w["b1"])

    return jnp.transpose(out.reshape(B, H, W, Ch), (0, 3, 1, 2))      # NCHW


# --------------------------- pure-JAX reference ----------------------------- #

def deconv_gru_cell_ref(input_, prev_state, params):
    B, Ci, H, W = input_.shape
    _, Ch, _, _ = prev_state.shape
    x = jnp.transpose(input_, (0, 2, 3, 1)).astype(jnp.float32)
    h = jnp.transpose(prev_state, (0, 2, 3, 1)).astype(jnp.float32)

    def convT(z, wt, b):
        w = _convT_weight_to_conv(wt)
        out = lax.conv_general_dilated(
            z, w, window_strides=(1, 1), padding=[(1, 1), (1, 1)],
            dimension_numbers=("NHWC", "HWIO", "NHWC"))
        return out + b.reshape(1, 1, 1, Ch)

    stacked = jnp.concatenate([x, h], axis=-1)
    update = jax.nn.sigmoid(convT(stacked, params["w_update"], params["b_update"]))
    reset = jax.nn.sigmoid(convT(stacked, params["w_reset"], params["b_reset"]))
    out_in = jax.nn.leaky_relu(
        convT(jnp.concatenate([x, h * reset], axis=-1),
              params["w_out"], params["b_out"]),
        negative_slope=0.2)
    new = h * (1.0 - update) + out_in * update
    return jnp.transpose(new, (0, 3, 1, 2))


# ----------------------------- parameter init ------------------------------ #

def _orthogonal(key, shape):
    """Mimics torch.nn.init.orthogonal_ (flatten to (shape[0], prod(rest)))."""
    rows = shape[0]
    cols = int(math.prod(shape[1:]))
    n, m = max(rows, cols), min(rows, cols)
    a = jax.random.normal(key, (n, m), dtype=jnp.float32)
    q, r = jnp.linalg.qr(a)
    q = q * jnp.sign(jnp.diagonal(r))
    if rows < cols:
        q = q.T
    return q[:rows, :cols].reshape(shape)


def init_params(key, input_size, hidden_size, kernel_size=3):
    C = input_size + hidden_size
    k1, k2, k3 = jax.random.split(key, 3)
    wshape = (C, hidden_size, kernel_size, kernel_size)  # ConvTranspose2d layout
    return {
        "w_update": _orthogonal(k1, wshape),
        "w_reset": _orthogonal(k2, wshape),
        "w_out": _orthogonal(k3, wshape),
        "b_update": jnp.zeros((hidden_size,), jnp.float32),
        "b_reset": jnp.zeros((hidden_size,), jnp.float32),
        "b_out": jnp.zeros((hidden_size,), jnp.float32),
    }


# ---------------------------------- main ----------------------------------- #

if __name__ == "__main__":
    B, Ci, Ch, H, W = 2, 4, 8, 16, 16

    key = jax.random.PRNGKey(0)
    kp, kx, kh = jax.random.split(key, 3)
    params = init_params(kp, input_size=Ci, hidden_size=Ch, kernel_size=3)

    x = jax.random.normal(kx, (B, Ci, H, W), dtype=jnp.float32)       # NCHW
    h0 = jax.random.normal(kh, (B, Ch, H, W), dtype=jnp.float32)      # NCHW

    gate_w = prepare_gate_weights(params, H=H, W=W, Ci=Ci, Ch=Ch, K=3)

    new_state = deconv_gru_cell(x, h0, gate_w)
    new_state = jax.block_until_ready(new_state)

    ref = jax.block_until_ready(deconv_gru_cell_ref(x, h0, params))
    max_err = float(jnp.max(jnp.abs(new_state - ref)))
    assert new_state.shape == (B, Ch, H, W)
    assert max_err < 1e-4, f"mismatch vs reference: {max_err}"

    print("KERNEL_OK")
</pallas_src>

<mosaic_0001>
module attributes {stable_mosaic.version = 11 : i64} {
  func.func @_deconv_gru_kernel(%arg0: i32, %arg1: memref<1x18x256xf32, #tpu.memory_space<vmem>>, %arg2: memref<1x16x128xf32, #tpu.memory_space<vmem>>, %arg3: memref<768x384xf32, #tpu.memory_space<vmem>>, %arg4: memref<384x128xf32, #tpu.memory_space<vmem>>, %arg5: memref<1x384xf32, #tpu.memory_space<vmem>>, %arg6: memref<1x16x128xf32, #tpu.memory_space<vmem>>) attributes {dimension_semantics = [#tpu.dimension_semantics<parallel>], iteration_bounds = array<i64: 2>, scalar_prefetch = 0 : i64, scratch_operands = 0 : i64, tpu.core_type = #tpu.core_type<tc>, window_params = [{transform_indices = @transform_0, window_bounds = array<i64: 1, 18, 256>}, {transform_indices = @transform_1, window_bounds = array<i64: 1, 16, 128>}, {pipeline_mode = #tpu.pipeline_mode<synchronous>, transform_indices = @transform_2, window_bounds = array<i64: 768, 384>}, {pipeline_mode = #tpu.pipeline_mode<synchronous>, transform_indices = @transform_3, window_bounds = array<i64: 384, 128>}, {pipeline_mode = #tpu.pipeline_mode<synchronous>, transform_indices = @transform_4, window_bounds = array<i64: 1, 384>}, {transform_indices = @transform_5, window_bounds = array<i64: 1, 16, 128>}]} {
    %c0 = arith.constant 0 : index
    %c0_0 = arith.constant 0 : index
    %c0_1 = arith.constant 0 : index
    %0 = vector.load %arg1[%c0, %c0_0, %c0_1] : memref<1x18x256xf32, #tpu.memory_space<vmem>>, vector<1x16x256xf32>
    %1 = vector.shape_cast %0 : vector<1x16x256xf32> to vector<16x256xf32>
    %c0_2 = arith.constant 0 : index
    %c1 = arith.constant 1 : index
    %c0_3 = arith.constant 0 : index
    %2 = vector.load %arg1[%c0_2, %c1, %c0_3] : memref<1x18x256xf32, #tpu.memory_space<vmem>>, vector<1x16x256xf32>
    %3 = vector.shape_cast %2 : vector<1x16x256xf32> to vector<16x256xf32>
    %c0_4 = arith.constant 0 : index
    %c2 = arith.constant 2 : index
    %c0_5 = arith.constant 0 : index
    %4 = vector.load %arg1[%c0_4, %c2, %c0_5] : memref<1x18x256xf32, #tpu.memory_space<vmem>>, vector<1x16x256xf32>
    %5 = vector.shape_cast %4 : vector<1x16x256xf32> to vector<16x256xf32>
    %6 = tpu.concatenate %1, %3, %5 in 1 : vector<16x256xf32>, vector<16x256xf32>, vector<16x256xf32> -> vector<16x768xf32>
    %c0_6 = arith.constant 0 : index
    %c0_7 = arith.constant 0 : index
    %7 = vector.load %arg3[%c0_6, %c0_7] : memref<768x384xf32, #tpu.memory_space<vmem>>, vector<768x384xf32>
    %cst = arith.constant dense<0.000000e+00> : vector<16x384xf32>
    %8 = tpu.matmul %6, %7, %cst {dimension_numbers = #tpu.dot_dimension_numbers<[1], [0], [0], [1], [0, 0, 1, 1], [], []>} : vector<16x768xf32>, vector<768x384xf32>, vector<16x384xf32> -> vector<16x384xf32>
    %c0_8 = arith.constant 0 : index
    %c0_9 = arith.constant 0 : index
    %9 = vector.load %arg5[%c0_8, %c0_9] : memref<1x384xf32, #tpu.memory_space<vmem>>, vector<1x384xf32>
    %10 = vector.broadcast %9 : vector<1x384xf32> to vector<16x384xf32>
    %11 = arith.addf %8, %10 : vector<16x384xf32>
    %12 = vector.extract_strided_slice %11 {offsets = [0, 0], sizes = [16, 128], strides = [1, 1]} : vector<16x384xf32> to vector<16x128xf32>
    %13 = arith.negf %12 : vector<16x128xf32>
    %14 = math.exp %13 : vector<16x128xf32>
    %cst_10 = arith.constant 1.000000e+00 : f32
    %15 = vector.broadcast %cst_10 : f32 to vector<16x128xf32>
    %16 = arith.addf %15, %14 : vector<16x128xf32>
    %17 = arith.divf %15, %16 : vector<16x128xf32>
    %18 = vector.extract_strided_slice %11 {offsets = [0, 128], sizes = [16, 128], strides = [1, 1]} : vector<16x384xf32> to vector<16x128xf32>
    %19 = arith.negf %18 : vector<16x128xf32>
    %20 = math.exp %19 : vector<16x128xf32>
    %cst_11 = arith.constant 1.000000e+00 : f32
    %21 = vector.broadcast %cst_11 : f32 to vector<16x128xf32>
    %22 = arith.addf %21, %20 : vector<16x128xf32>
    %23 = arith.divf %21, %22 : vector<16x128xf32>
    %24 = vector.extract_strided_slice %11 {offsets = [0, 256], sizes = [16, 128], strides = [1, 1]} : vector<16x384xf32> to vector<16x128xf32>
    %c0_12 = arith.constant 0 : index
    %c0_13 = arith.constant 0 : index
    %c0_14 = arith.constant 0 : index
    %25 = vector.load %arg2[%c0_12, %c0_13, %c0_14] : memref<1x16x128xf32, #tpu.memory_space<vmem>>, vector<1x16x128xf32>
    %26 = vector.shape_cast %25 : vector<1x16x128xf32> to vector<16x128xf32>
    %27 = arith.mulf %26, %23 : vector<16x128xf32>
    %cst_15 = arith.constant 0.000000e+00 : f32
    %28 = vector.broadcast %cst_15 : f32 to vector<1x128xf32>
    %29 = vector.extract_strided_slice %27 {offsets = [0, 0], sizes = [15, 128], strides = [1, 1]} : vector<16x128xf32> to vector<15x128xf32>
    %30 = tpu.concatenate %28, %29 in 0 : vector<1x128xf32>, vector<15x128xf32> -> vector<16x128xf32>
    %31 = vector.extract_strided_slice %27 {offsets = [1, 0], sizes = [15, 128], strides = [1, 1]} : vector<16x128xf32> to vector<15x128xf32>
    %cst_16 = arith.constant 0.000000e+00 : f32
    %32 = vector.broadcast %cst_16 : f32 to vector<1x128xf32>
    %33 = tpu.concatenate %31, %32 in 0 : vector<15x128xf32>, vector<1x128xf32> -> vector<16x128xf32>
    %34 = tpu.concatenate %30, %27, %33 in 1 : vector<16x128xf32>, vector<16x128xf32>, vector<16x128xf32> -> vector<16x384xf32>
    %c0_17 = arith.constant 0 : index
    %c0_18 = arith.constant 0 : index
    %35 = vector.load %arg4[%c0_17, %c0_18] : memref<384x128xf32, #tpu.memory_space<vmem>>, vector<384x128xf32>
    %cst_19 = arith.constant dense<0.000000e+00> : vector<16x128xf32>
    %36 = tpu.matmul %34, %35, %cst_19 {dimension_numbers = #tpu.dot_dimension_numbers<[1], [0], [0], [1], [0, 0, 1, 1], [], []>} : vector<16x384xf32>, vector<384x128xf32>, vector<16x128xf32> -> vector<16x128xf32>
    %37 = arith.addf %24, %36 : vector<16x128xf32>
    %cst_20 = arith.constant 0.000000e+00 : f32
    %38 = vector.broadcast %cst_20 : f32 to vector<16x128xf32>
    %39 = arith.cmpf oge, %37, %38 : vector<16x128xf32>
    %cst_21 = arith.constant 2.000000e-01 : f32
    %40 = vector.broadcast %cst_21 : f32 to vector<16x128xf32>
    %41 = arith.mulf %40, %37 : vector<16x128xf32>
    %42 = arith.select %39, %37, %41 : vector<16x128xi1>, vector<16x128xf32>
    %cst_22 = arith.constant 1.000000e+00 : f32
    %43 = vector.broadcast %cst_22 : f32 to vector<16x128xf32>
    %44 = arith.subf %43, %17 : vector<16x128xf32>
    %45 = arith.mulf %26, %44 : vector<16x128xf32>
    %46 = arith.mulf %42, %17 : vector<16x128xf32>
    %47 = arith.addf %45, %46 : vector<16x128xf32>
    %c0_23 = arith.constant 0 : index
    %c0_24 = arith.constant 0 : index
    %c0_25 = arith.constant 0 : index
    %48 = vector.load %arg6[%c0_23, %c0_24, %c0_25] : memref<1x16x128xf32, #tpu.memory_space<vmem>>, vector<1x16x128xf32>
    %49 = vector.shape_cast %48 : vector<1x16x128xf32> to vector<16x128xf32>
    %50 = vector.shape_cast %47 : vector<16x128xf32> to vector<1x16x128xf32>
    tpu.vector_store %arg6[%c0_23, %c0_24, %c0_25], %50 {strides = array<i32>} : memref<1x16x128xf32, #tpu.memory_space<vmem>>, vector<1x16x128xf32>,
    return
  }
  func.func @transform_0(%arg0: i32) -> (i32, i32, i32) {
    %c0_i32 = arith.constant 0 : i32
    %c0_i32_0 = arith.constant 0 : i32
    %c0_i32_1 = arith.constant 0 : i32
    return %arg0, %c0_i32, %c0_i32_0 : i32, i32, i32
  }
  func.func @transform_1(%arg0: i32) -> (i32, i32, i32) {
    %c0_i32 = arith.constant 0 : i32
    %c0_i32_0 = arith.constant 0 : i32
    %c0_i32_1 = arith.constant 0 : i32
    return %arg0, %c0_i32, %c0_i32_0 : i32, i32, i32
  }
  func.func @transform_2(%arg0: i32) -> (i32, i32) {
    %c0_i32 = arith.constant 0 : i32
    %c0_i32_0 = arith.constant 0 : i32
    %c0_i32_1 = arith.constant 0 : i32
    return %c0_i32, %c0_i32_0 : i32, i32
  }
  func.func @transform_3(%arg0: i32) -> (i32, i32) {
    %c0_i32 = arith.constant 0 : i32
    %c0_i32_0 = arith.constant 0 : i32
    %c0_i32_1 = arith.constant 0 : i32
    return %c0_i32, %c0_i32_0 : i32, i32
  }
  func.func @transform_4(%arg0: i32) -> (i32, i32) {
    %c0_i32 = arith.constant 0 : i32
    %c0_i32_0 = arith.constant 0 : i32
    %c0_i32_1 = arith.constant 0 : i32
    return %c0_i32, %c0_i32_0 : i32, i32
  }
  func.func @transform_5(%arg0: i32) -> (i32, i32, i32) {
    %c0_i32 = arith.constant 0 : i32
    %c0_i32_0 = arith.constant 0 : i32
    %c0_i32_1 = arith.constant 0 : i32
    return %arg0, %c0_i32, %c0_i32_0 : i32, i32, i32
  }
}

</mosaic_0001>

<llo_original>
// kernel: deconv_gru_cell.1
$region0: #{deconv_gru_cell.1}
  #allocation0 [shape = 'u32[]', space=smem, size = 0x4, offset = 0x4, fixed_abs, tag = 'smem constant byte address 0x4 - core index']
  #allocation1 [shape = 'u32[72,128]{1,0:T(1,128)}', space=vmem, size = 0x9000, scoped, tag = 'internal scratch']
  %s0 = inlined_call_operand.vmem [shape: f32[2,18,256], index: 0, kind: input, shape index: {}]
  %s1 = inlined_call_operand.vmem [shape: f32[2,16,128], index: 1, kind: input, shape index: {}]
  %s2 = inlined_call_operand.vmem [shape: f32[768,384], index: 2, kind: input, shape index: {}]
  %s3 = inlined_call_operand.vmem [shape: f32[384,128], index: 3, kind: input, shape index: {}]
  %s4 = inlined_call_operand.vmem [shape: f32[1,384], index: 4, kind: input, shape index: {}]
  %s5 = inlined_call_operand.vmem [shape: f32[2,16,128], index: 5, kind: output, shape index: {}]
  %s6 = sld [smem:[#allocation0]]
  $region53: #{deconv_gru_cell.1} parent=0
    _
  %s8 = ssub.s32 1, %s6
  %s9 = scalar_select 0, %s8, %s6
  loop: start=0, step=1, limit=4
  $region2: #{deconv_gru_cell.1} parent=0 // loop_pre_header
    _
  $region3: #{deconv_gru_cell.1} parent=0 // loop_header
    %s11 = sphi 0, %s15
    %p12 = scmp.ge.s32.totalorder %s11, 4
    %s21 = sphi 0, %s23
    %s24 = sphi 0, %s21
    %s25 = sphi 0, %s24
    %s41 = sphi 0, %s25
    %s47 = sphi 0, %s49
    %s50 = sphi 0, %s47
    %s51 = sphi 0, %s50
    %s67 = sphi 0, %s51
    %s71 = sphi 0, %s71
    %s73 = sphi 0, %s71
    %s74 = sphi 0, %s73
    %s88 = sphi 0, %s74
    %s92 = sphi 0, %s92
    %s94 = sphi 0, %s92
    %s95 = sphi 0, %s94
    %s109 = sphi 0, %s95
    %s113 = sphi 0, %s113
    %s115 = sphi 0, %s113
    %s116 = sphi 0, %s115
    %s130 = sphi 0, %s116
    %s136 = sphi 0, %s138
    %s139 = sphi 0, %s136
    %s140 = sphi 0, %s139
    %s156 = sphi 0, %s140
  $region4: #{deconv_gru_cell.1} parent=0 // loop_header_branch
    %14 = sbr.rel (%p12) target = $region8
  $region5: #{deconv_gru_cell.1} parent=0 // loop_body
    %s16 = ssub.s32 %s11, 1
    %s17 = ssub.s32 %s11, 2
    %s18 = sadd.s32 %s11, 1
    %s19 = ssub.s32 %s11, %s18
    %p20 = scmp.eq.s32.totalorder %s19, 0
    %s22 = sadd.s32 %s21, 1
    %s23 = scalar_select %p20, %s21, %s22
    %p26 = pneg %p20
    %p27 = scmp.eq.s32.totalorder %s11, 1
    %p28 = por %p26, %p27
    %p29 = scmp.ne.s32.totalorder %s21, %s24
    %p30 = scmp.eq.s32.totalorder %s11, 0
    %p31 = por %p29, %p30
    %p32 = scmp.ne.s32.totalorder %s21, %s24
    %p33 = scmp.eq.s32.totalorder %s16, 1
    %p34 = por %p32, %p33
    %p35 = scmp.ne.s32.totalorder %s24, %s25
    %p36 = scmp.eq.s32.totalorder %s16, 0
    %p37 = por %p35, %p36
    %p38 = scmp.ne.s32.totalorder %s24, %s25
    %p39 = scmp.eq.s32.totalorder %s17, 1
    %p40 = por %p38, %p39
    %p42 = scmp.ne.s32.totalorder %s25, %s41
    %p43 = scmp.eq.s32.totalorder %s17, 0
    %p44 = por %p42, %p43
    %s45 = ssub.s32 %s11, %s18
    %p46 = scmp.eq.s32.totalorder %s45, 0
    %s48 = sadd.s32 %s47, 1
    %s49 = scalar_select %p46, %s47, %s48
    %p52 = pneg %p46
    %p53 = scmp.eq.s32.totalorder %s11, 1
    %p54 = por %p52, %p53
    %p55 = scmp.ne.s32.totalorder %s47, %s50
    %p56 = scmp.eq.s32.totalorder %s11, 0
    %p57 = por %p55, %p56
    %p58 = scmp.ne.s32.totalorder %s47, %s50
    %p59 = scmp.eq.s32.totalorder %s16, 1
    %p60 = por %p58, %p59
    %p61 = scmp.ne.s32.totalorder %s50, %s51
    %p62 = scmp.eq.s32.totalorder %s16, 0
    %p63 = por %p61, %p62
    %p64 = scmp.ne.s32.totalorder %s50, %s51
    %p65 = scmp.eq.s32.totalorder %s17, 1
    %p66 = por %p64, %p65
    %p68 = scmp.ne.s32.totalorder %s51, %s67
    %p69 = scmp.eq.s32.totalorder %s17, 0
    %p70 = por %p68, %p69
    %s72 = sadd.s32 %s71, 1
    %p75 = scmp.eq.s32.totalorder %s11, 1
    %p76 = scmp.ne.s32.totalorder %s71, %s73
    %p77 = scmp.eq.s32.totalorder %s11, 0
    %p78 = por %p76, %p77
    %p79 = scmp.ne.s32.totalorder %s71, %s73
    %p80 = scmp.eq.s32.totalorder %s16, 1
    %p81 = por %p79, %p80
    %p82 = scmp.ne.s32.totalorder %s73, %s74
    %p83 = scmp.eq.s32.totalorder %s16, 0
    %p84 = por %p82, %p83
    %p85 = scmp.ne.s32.totalorder %s73, %s74
    %p86 = scmp.eq.s32.totalorder %s17, 1
    %p87 = por %p85, %p86
    %p89 = scmp.ne.s32.totalorder %s74, %s88
    %p90 = scmp.eq.s32.totalorder %s17, 0
    %p91 = por %p89, %p90
    %s93 = sadd.s32 %s92, 1
    %p96 = scmp.eq.s32.totalorder %s11, 1
    %p97 = scmp.ne.s32.totalorder %s92, %s94
    %p98 = scmp.eq.s32.totalorder %s11, 0
    %p99 = por %p97, %p98
    %p100 = scmp.ne.s32.totalorder %s92, %s94
    %p101 = scmp.eq.s32.totalorder %s16, 1
    %p102 = por %p100, %p101
    %p103 = scmp.ne.s32.totalorder %s94, %s95
    %p104 = scmp.eq.s32.totalorder %s16, 0
    %p105 = por %p103, %p104
    %p106 = scmp.ne.s32.totalorder %s94, %s95
    %p107 = scmp.eq.s32.totalorder %s17, 1
    %p108 = por %p106, %p107
    %p110 = scmp.ne.s32.totalorder %s95, %s109
    %p111 = scmp.eq.s32.totalorder %s17, 0
    %p112 = por %p110, %p111
    %s114 = sadd.s32 %s113, 1
    %p117 = scmp.eq.s32.totalorder %s11, 1
    %p118 = scmp.ne.s32.totalorder %s113, %s115
    %p119 = scmp.eq.s32.totalorder %s11, 0
    %p120 = por %p118, %p119
    %p121 = scmp.ne.s32.totalorder %s113, %s115
    %p122 = scmp.eq.s32.totalorder %s16, 1
    %p123 = por %p121, %p122
    %p124 = scmp.ne.s32.totalorder %s115, %s116
    %p125 = scmp.eq.s32.totalorder %s16, 0
    %p126 = por %p124, %p125
    %p127 = scmp.ne.s32.totalorder %s115, %s116
    %p128 = scmp.eq.s32.totalorder %s17, 1
    %p129 = por %p127, %p128
    %p131 = scmp.ne.s32.totalorder %s116, %s130
    %p132 = scmp.eq.s32.totalorder %s17, 0
    %p133 = por %p131, %p132
    %s134 = ssub.s32 %s11, %s18
    %p135 = scmp.eq.s32.totalorder %s134, 0
    %s137 = sadd.s32 %s136, 1
    %s138 = scalar_select %p135, %s136, %s137
    %p141 = pneg %p135
    %p142 = scmp.eq.s32.totalorder %s11, 1
    %p143 = por %p141, %p142
    %p144 = scmp.ne.s32.totalorder %s136, %s139
    %p145 = scmp.eq.s32.totalorder %s11, 0
    %p146 = por %p144, %p145
    %p147 = scmp.ne.s32.totalorder %s136, %s139
    %p148 = scmp.eq.s32.totalorder %s16, 1
    %p149 = por %p147, %p148
    %p150 = scmp.ne.s32.totalorder %s139, %s140
    %p151 = scmp.eq.s32.totalorder %s16, 0
    %p152 = por %p150, %p151
    %p153 = scmp.ne.s32.totalorder %s139, %s140
    %p154 = scmp.eq.s32.totalorder %s17, 1
    %p155 = por %p153, %p154
    %p157 = scmp.ne.s32.totalorder %s140, %s156
    %p158 = scmp.eq.s32.totalorder %s17, 0
    %p159 = por %p157, %p158
    %p160 = scmp.le.s32.totalorder 1, %s11
    %p161 = scmp.lt.s32.totalorder %s11, 3
    %p162 = pnand %p160, %p161
    %p163 = pneg %p162
    // Predicated region
    $region9: #{deconv_gru_cell.1} parent=5 // pred_check
      _
    $region10: #{deconv_gru_cell.1} parent=5 // pred_check_branch
      %165 = sbr.rel (%p162) target = $region12
    $region11: #{deconv_gru_cell.1} parent=5 // pred_region
      %s166 = ssub.s32 %s11, 1
      // Predicated region
      $region13: #{deconv_gru_cell.1} parent=11 // pred_check
        %p167 = pneg %p84
      $region14: #{deconv_gru_cell.1} parent=11 // pred_check_branch
        %169 = sbr.rel (%p167) target = $region16
      $region15: #{deconv_gru_cell.1} parent=11 // pred_region
        _
      $region16: #{deconv_gru_cell.1} parent=11 // pred_fallthru
        _
      // Predicated region
      $region17: #{deconv_gru_cell.1} parent=11 // pred_check
        %p170 = pneg %p105
      $region18: #{deconv_gru_cell.1} parent=11 // pred_check_branch
        %172 = sbr.rel (%p170) target = $region20
      $region19: #{deconv_gru_cell.1} parent=11 // pred_region
        _
      $region20: #{deconv_gru_cell.1} parent=11 // pred_fallthru
        _
      // Predicated region
      $region21: #{deconv_gru_cell.1} parent=11 // pred_check
        %p173 = pneg %p126
      $region22: #{deconv_gru_cell.1} parent=11 // pred_check_branch
        %175 = sbr.rel (%p173) target = $region24
      $region23: #{deconv_gru_cell.1} parent=11 // pred_region
        _
      $region24: #{deconv_gru_cell.1} parent=11 // pred_fallthru
        _
    $region12: #{deconv_gru_cell.1} parent=5 // pred_fallthru
      _
    %p176 = scmp.lt.s32.totalorder %s11, 2
    // Predicated region
    $region25: #{deconv_gru_cell.1} parent=5 // pred_check
      %p177 = pneg %p176
    $region26: #{deconv_gru_cell.1} parent=5 // pred_check_branch
      %179 = sbr.rel (%p177) target = $region28
    $region27: #{deconv_gru_cell.1} parent=5 // pred_region
      // Predicated region
      $region29: #{deconv_gru_cell.1} parent=27 // pred_check
        %p180 = pneg %p31
      $region30: #{deconv_gru_cell.1} parent=27 // pred_check_branch
        %182 = sbr.rel (%p180) target = $region32
      $region31: #{deconv_gru_cell.1} parent=27 // pred_region
        %p183 = scmp.lt.s32.totalorder %s11, 1
        %s184 = scalar_select %p183, %s11, 1
        %s185 = smul.addr %s184, 6
        %s186 = smul.addr %s185, 8
        %s187 = scalar_lea.vmem %s0, %s186
      $region32: #{deconv_gru_cell.1} parent=27 // pred_fallthru
        _
      // Predicated region
      $region33: #{deconv_gru_cell.1} parent=27 // pred_check
        %p188 = pneg %p57
      $region34: #{deconv_gru_cell.1} parent=27 // pred_check_branch
        %190 = sbr.rel (%p188) target = $region36
      $region35: #{deconv_gru_cell.1} parent=27 // pred_region
        %p191 = scmp.lt.s32.totalorder %s11, 1
        %s192 = scalar_select %p191, %s11, 1
        %s193 = smul.addr %s192, 2
        %s194 = smul.addr %s193, 8
        %s195 = scalar_lea.vmem %s1, %s194
      $region36: #{deconv_gru_cell.1} parent=27 // pred_fallthru
        _
    $region28: #{deconv_gru_cell.1} parent=5 // pred_fallthru
      _
    %p196 = scmp.le.s32.totalorder 1, %s11
    %p197 = scmp.lt.s32.totalorder %s11, 3
    %p198 = pnand %p196, %p197
    %p199 = pneg %p198
    // Predicated region
    $region37: #{deconv_gru_cell.1} parent=5 // pred_check
      _
    $region38: #{deconv_gru_cell.1} parent=5 // pred_check_branch
      %201 = sbr.rel (%p198) target = $region40
    $region39: #{deconv_gru_cell.1} parent=5 // pred_region
      %s202 = ssub.s32 %s11, 1
      %p203 = scmp.lt.s32.totalorder %s16, 1
      %s204 = scalar_select %p203, %s16, 1
      %s205 = smul.addr %s204, 6
      %s206 = smul.addr %s205, 8
      %s207 = scalar_lea.vmem %s0, %s206
      %p208 = pneg %p37
      %p209 = pneg %p34
      %p210 = scmp.lt.s32.totalorder %s16, 1
      %s211 = scalar_select %p210, %s16, 1
      %s212 = smul.addr %s211, 2
      %s213 = smul.addr %s212, 8
      %s214 = scalar_lea.vmem %s1, %s213
      %p215 = pneg %p63
      %p216 = pneg %p60
      %p217 = pneg %p84
      %p218 = pneg %p81
      %p219 = pneg %p105
      %p220 = pneg %p102
      %p221 = pneg %p126
      %p222 = pneg %p123
      %p223 = pneg %p152
      %p224 = pneg %p149
      %p225 = scmp.lt.s32.totalorder %s16, 1
      %s226 = scalar_select %p225, %s16, 1
      %s227 = smul.addr %s226, 2
      %s228 = smul.addr %s227, 8
      %s229 = scalar_lea.vmem %s5, %s228
      %p230 = scmp.lt.s32.totalorder %s16, 1
      %s231 = scalar_select %p230, %s16, 1
      %s232 = smul.addr %s231, 6
      %s233 = smul.addr %s232, 8
      %s234 = scalar_lea.vmem %s0, %s233
      %p235 = scmp.lt.s32.totalorder %s16, 1
      %s236 = scalar_select %p235, %s16, 1
      %s237 = smul.addr %s236, 2
      %s238 = smul.addr %s237, 8
      %s239 = scalar_lea.vmem %s1, %s238
      %p240 = scmp.lt.s32.totalorder %s16, 1
      %s241 = scalar_select %p240, %s16, 1
      %s242 = smul.addr %s241, 2
      %s243 = smul.addr %s242, 8
      %s244 = scalar_lea.vmem %s5, %s243
      %v245 = vld [vmem:[%s234] sm:$0xff]
      %v246 = vld [vmem:[%s234 + $0x8] sm:$0xff]
      %v247 = vld [vmem:[%s234 + $0x10] sm:$0xff]
      %v248 = vld [vmem:[%s234 + $0x18] sm:$0xff]
      %v249 = vld [vmem:[%s234] sm:$0xfe]
      %v250 = vld [vmem:[%s234 + $0x8] sm:$0xfe]
      %v251 = vld [vmem:[%s234 + $0x20] sm:$0x1]
      %v252 = vld [vmem:[%s234 + $0x28] sm:$0x1]
      %v253 = vld [vmem:[%s234] sm:$0xfc]
      %v254 = vld [vmem:[%s234 + $0x8] sm:$0xfc]
      %v255 = vld [vmem:[%s234 + $0x20] sm:$0x3]
      %v256 = vld [vmem:[%s234 + $0x28] sm:$0x3]
      %vm263 = vcmask 1046528
      %v264 = vrot.slane %v249, 1
      %v265 = vrot.slane %v247, 1
      %v266 = vsel %vm263, %v264, %v265
      %v267 = vrot.slane %v250, 1
      %v268 = vrot.slane %v248, 1
      %v269 = vsel %vm263, %v267, %v268
      %v270 = vrot.slane %v251, 1
      %v271 = vsel %vm263, %v265, %v270
      %v272 = vrot.slane %v252, 1
      %v273 = vsel %vm263, %v268, %v272
      %vm282 = vcmask 1045504
      %v283 = vrot.slane %v253, 2
      %v284 = vrot.slane %v247, 2
      %v285 = vsel %vm282, %v283, %v284
      %v286 = vrot.slane %v254, 2
      %v287 = vrot.slane %v248, 2
      %v288 = vsel %vm282, %v286, %v287
      %v289 = vrot.slane %v255, 2
      %v290 = vsel %vm282, %v284, %v289
      %v291 = vrot.slane %v256, 2
      %v292 = vsel %vm282, %v287, %v291
      %v297 = vld [vmem:[%s2] sm:$0xff]
      %v298 = vld [vmem:[%s2 + $0x8] sm:$0xff]
      %v299 = vld [vmem:[%s2 + $0x10] sm:$0xff]
      %v300 = vld [vmem:[%s2 + $0x18] sm:$0xff]
      %v301 = vld [vmem:[%s2 + $0x20] sm:$0xff]
      %v302 = vld [vmem:[%s2 + $0x28] sm:$0xff]
      %v303 = vld [vmem:[%s2 + $0x30] sm:$0xff]
      %v304 = vld [vmem:[%s2 + $0x38] sm:$0xff]
      %v305 = vld [vmem:[%s2 + $0x40] sm:$0xff]
      %v306 = vld [vmem:[%s2 + $0x48] sm:$0xff]
      %v307 = vld [vmem:[%s2 + $0x50] sm:$0xff]
      %v308 = vld [vmem:[%s2 + $0x58] sm:$0xff]
      %v309 = vld [vmem:[%s2 + $0x60] sm:$0xff]
      %v310 = vld [vmem:[%s2 + $0x68] sm:$0xff]
      %v311 = vld [vmem:[%s2 + $0x70] sm:$0xff]
      %v312 = vld [vmem:[%s2 + $0x78] sm:$0xff]
      %v313 = vld [vmem:[%s2 + $0x80] sm:$0xff]
      %v314 = vld [vmem:[%s2 + $0x88] sm:$0xff]
      %v315 = vld [vmem:[%s2 + $0x90] sm:$0xff]
      %v316 = vld [vmem:[%s2 + $0x98] sm:$0xff]
      %v317 = vld [vmem:[%s2 + $0xa0] sm:$0xff]
      %v318 = vld [vmem:[%s2 + $0xa8] sm:$0xff]
      %v319 = vld [vmem:[%s2 + $0xb0] sm:$0xff]
      %v320 = vld [vmem:[%s2 + $0xb8] sm:$0xff]
      %v321 = vld [vmem:[%s2 + $0xc0] sm:$0xff]
      %v322 = vld [vmem:[%s2 + $0xc8] sm:$0xff]
      %v323 = vld [vmem:[%s2 + $0xd0] sm:$0xff]
      %v324 = vld [vmem:[%s2 + $0xd8] sm:$0xff]
      %v325 = vld [vmem:[%s2 + $0xe0] sm:$0xff]
      %v326 = vld [vmem:[%s2 + $0xe8] sm:$0xff]
      %v327 = vld [vmem:[%s2 + $0xf0] sm:$0xff]
      %v328 = vld [vmem:[%s2 + $0xf8] sm:$0xff]
      %v329 = vld [vmem:[%s2 + $0x100] sm:$0xff]
      %v330 = vld [vmem:[%s2 + $0x108] sm:$0xff]
      %v331 = vld [vmem:[%s2 + $0x110] sm:$0xff]
      %v332 = vld [vmem:[%s2 + $0x118] sm:$0xff]
      %v333 = vld [vmem:[%s2 + $0x120] sm:$0xff]
      %v334 = vld [vmem:[%s2 + $0x128] sm:$0xff]
      %v335 = vld [vmem:[%s2 + $0x130] sm:$0xff]
      %v336 = vld [vmem:[%s2 + $0x138] sm:$0xff]
      %v337 = vld [vmem:[%s2 + $0x140] sm:$0xff]
      %v338 = vld [vmem:[%s2 + $0x148] sm:$0xff]
      %v339 = vld [vmem:[%s2 + $0x150] sm:$0xff]
      %v340 = vld [vmem:[%s2 + $0x158] sm:$0xff]
      %v341 = vld [vmem:[%s2 + $0x160] sm:$0xff]
      %v342 = vld [vmem:[%s2 + $0x168] sm:$0xff]
      %v343 = vld [vmem:[%s2 + $0x170] sm:$0xff]
      %v344 = vld [vmem:[%s2 + $0x178] sm:$0xff]
      %v345 = vld [vmem:[%s2 + $0x180] sm:$0xff]
      %v346 = vld [vmem:[%s2 + $0x188] sm:$0xff]
      %v347 = vld [vmem:[%s2 + $0x190] sm:$0xff]
      %v348 = vld [vmem:[%s2 + $0x198] sm:$0xff]
      %v349 = vld [vmem:[%s2 + $0x1a0] sm:$0xff]
      %v350 = vld [vmem:[%s2 + $0x1a8] sm:$0xff]
      %v351 = vld [vmem:[%s2 + $0x1b0] sm:$0xff]
      %v352 = vld [vmem:[%s2 + $0x1b8] sm:$0xff]
      %v353 = vld [vmem:[%s2 + $0x1c0] sm:$0xff]
      %v354 = vld [vmem:[%s2 + $0x1c8] sm:$0xff]
      %v355 = vld [vmem:[%s2 + $0x1d0] sm:$0xff]
      %v356 = vld [vmem:[%s2 + $0x1d8] sm:$0xff]
      %v357 = vld [vmem:[%s2 + $0x1e0] sm:$0xff]
      %v358 = vld [vmem:[%s2 + $0x1e8] sm:$0xff]
      %v359 = vld [vmem:[%s2 + $0x1f0] sm:$0xff]
      %v360 = vld [vmem:[%s2 + $0x1f8] sm:$0xff]
      %v361 = vld [vmem:[%s2 + $0x200] sm:$0xff]
      %v362 = vld [vmem:[%s2 + $0x208] sm:$0xff]
      %v363 = vld [vmem:[%s2 + $0x210] sm:$0xff]
      %v364 = vld [vmem:[%s2 + $0x218] sm:$0xff]
      %v365 = vld [vmem:[%s2 + $0x220] sm:$0xff]
      %v366 = vld [vmem:[%s2 + $0x228] sm:$0xff]
      %v367 = vld [vmem:[%s2 + $0x230] sm:$0xff]
      %v368 = vld [vmem:[%s2 + $0x238] sm:$0xff]
      %v369 = vld [vmem:[%s2 + $0x240] sm:$0xff]
      %v370 = vld [vmem:[%s2 + $0x248] sm:$0xff]
      %v371 = vld [vmem:[%s2 + $0x250] sm:$0xff]
      %v372 = vld [vmem:[%s2 + $0x258] sm:$0xff]
      %v373 = vld [vmem:[%s2 + $0x260] sm:$0xff]
      %v374 = vld [vmem:[%s2 + $0x268] sm:$0xff]
      %v375 = vld [vmem:[%s2 + $0x270] sm:$0xff]
      %v376 = vld [vmem:[%s2 + $0x278] sm:$0xff]
      %v377 = vld [vmem:[%s2 + $0x280] sm:$0xff]
      %v378 = vld [vmem:[%s2 + $0x288] sm:$0xff]
      %v379 = vld [vmem:[%s2 + $0x290] sm:$0xff]
      %v380 = vld [vmem:[%s2 + $0x298] sm:$0xff]
      %v381 = vld [vmem:[%s2 + $0x2a0] sm:$0xff]
      %v382 = vld [vmem:[%s2 + $0x2a8] sm:$0xff]
      %v383 = vld [vmem:[%s2 + $0x2b0] sm:$0xff]
      %v384 = vld [vmem:[%s2 + $0x2b8] sm:$0xff]
      %v385 = vld [vmem:[%s2 + $0x2c0] sm:$0xff]
      %v386 = vld [vmem:[%s2 + $0x2c8] sm:$0xff]
      %v387 = vld [vmem:[%s2 + $0x2d0] sm:$0xff]
      %v388 = vld [vmem:[%s2 + $0x2d8] sm:$0xff]
      %v389 = vld [vmem:[%s2 + $0x2e0] sm:$0xff]
      %v390 = vld [vmem:[%s2 + $0x2e8] sm:$0xff]
      %v391 = vld [vmem:[%s2 + $0x2f0] sm:$0xff]
      %v392 = vld [vmem:[%s2 + $0x2f8] sm:$0xff]
      %v393 = vld [vmem:[%s2 + $0x300] sm:$0xff]
      %v394 = vld [vmem:[%s2 + $0x308] sm:$0xff]
      %v395 = vld [vmem:[%s2 + $0x310] sm:$0xff]
      %v396 = vld [vmem:[%s2 + $0x318] sm:$0xff]
      %v397 = vld [vmem:[%s2 + $0x320] sm:$0xff]
      %v398 = vld [vmem:[%s2 + $0x328] sm:$0xff]
      %v399 = vld [vmem:[%s2 + $0x330] sm:$0xff]
      %v400 = vld [vmem:[%s2 + $0x338] sm:$0xff]
      %v401 = vld [vmem:[%s2 + $0x340] sm:$0xff]
      %v402 = vld [vmem:[%s2 + $0x348] sm:$0xff]
      %v403 = vld [vmem:[%s2 + $0x350] sm:$0xff]
      %v404 = vld [vmem:[%s2 + $0x358] sm:$0xff]
      %v405 = vld [vmem:[%s2 + $0x360] sm:$0xff]
      %v406 = vld [vmem:[%s2 + $0x368] sm:$0xff]
      %v407 = vld [vmem:[%s2 + $0x370] sm:$0xff]
      %v408 = vld [vmem:[%s2 + $0x378] sm:$0xff]
      %v409 = vld [vmem:[%s2 + $0x380] sm:$0xff]
      %v410 = vld [vmem:[%s2 + $0x388] sm:$0xff]
      %v411 = vld [vmem:[%s2 + $0x390] sm:$0xff]
      %v412 = vld [vmem:[%s2 + $0x398] sm:$0xff]
      %v413 = vld [vmem:[%s2 + $0x3a0] sm:$0xff]
      %v414 = vld [vmem:[%s2 + $0x3a8] sm:$0xff]
      %v415 = vld [vmem:[%s2 + $0x3b0] sm:$0xff]
      %v416 = vld [vmem:[%s2 + $0x3b8] sm:$0xff]
      %v417 = vld [vmem:[%s2 + $0x3c0] sm:$0xff]
      %v418 = vld [vmem:[%s2 + $0x3c8] sm:$0xff]
      %v419 = vld [vmem:[%s2 + $0x3d0] sm:$0xff]
      %v420 = vld [vmem:[%s2 + $0x3d8] sm:$0xff]
      %v421 = vld [vmem:[%s2 + $0x3e0] sm:$0xff]
      %v422 = vld [vmem:[%s2 + $0x3e8] sm:$0xff]
      %v423 = vld [vmem:[%s2 + $0x3f0] sm:$0xff]
      %v424 = vld [vmem:[%s2 + $0x3f8] sm:$0xff]
      %v425 = vld [vmem:[%s2 + $0x400] sm:$0xff]
      %v426 = vld [vmem:[%s2 + $0x408] sm:$0xff]
      %v427 = vld [vmem:[%s2 + $0x410] sm:$0xff]
      %v428 = vld [vmem:[%s2 + $0x418] sm:$0xff]
      %v429 = vld [vmem:[%s2 + $0x420] sm:$0xff]
      %v430 = vld [vmem:[%s2 + $0x428] sm:$0xff]
      %v431 = vld [vmem:[%s2 + $0x430] sm:$0xff]
      %v432 = vld [vmem:[%s2 + $0x438] sm:$0xff]
      %v433 = vld [vmem:[%s2 + $0x440] sm:$0xff]
      %v434 = vld [vmem:[%s2 + $0x448] sm:$0xff]
      %v435 = vld [vmem:[%s2 + $0x450] sm:$0xff]
      %v436 = vld [vmem:[%s2 + $0x458] sm:$0xff]
      %v437 = vld [vmem:[%s2 + $0x460] sm:$0xff]
      %v438 = vld [vmem:[%s2 + $0x468] sm:$0xff]
      %v439 = vld [vmem:[%s2 + $0x470] sm:$0xff]
      %v440 = vld [vmem:[%s2 + $0x478] sm:$0xff]
      %v441 = vld [vmem:[%s2 + $0x480] sm:$0xff]
      %v442 = vld [vmem:[%s2 + $0x488] sm:$0xff]
      %v443 = vld [vmem:[%s2 + $0x490] sm:$0xff]
      %v444 = vld [vmem:[%s2 + $0x498] sm:$0xff]
      %v445 = vld [vmem:[%s2 + $0x4a0] sm:$0xff]
      %v446 = vld [vmem:[%s2 + $0x4a8] sm:$0xff]
      %v447 = vld [vmem:[%s2 + $0x4b0] sm:$0xff]
      %v448 = vld [vmem:[%s2 + $0x4b8] sm:$0xff]
      %v449 = vld [vmem:[%s2 + $0x4c0] sm:$0xff]
      %v450 = vld [vmem:[%s2 + $0x4c8] sm:$0xff]
      %v451 = vld [vmem:[%s2 + $0x4d0] sm:$0xff]
      %v452 = vld [vmem:[%s2 + $0x4d8] sm:$0xff]
      %v453 = vld [vmem:[%s2 + $0x4e0] sm:$0xff]
      %v454 = vld [vmem:[%s2 + $0x4e8] sm:$0xff]
      %v455 = vld [vmem:[%s2 + $0x4f0] sm:$0xff]
      %v456 = vld [vmem:[%s2 + $0x4f8] sm:$0xff]
      %v457 = vld [vmem:[%s2 + $0x500] sm:$0xff]
      %v458 = vld [vmem:[%s2 + $0x508] sm:$0xff]
      %v459 = vld [vmem:[%s2 + $0x510] sm:$0xff]
      %v460 = vld [vmem:[%s2 + $0x518] sm:$0xff]
      %v461 = vld [vmem:[%s2 + $0x520] sm:$0xff]
      %v462 = vld [vmem:[%s2 + $0x528] sm:$0xff]
      %v463 = vld [vmem:[%s2 + $0x530] sm:$0xff]
      %v464 = vld [vmem:[%s2 + $0x538] sm:$0xff]
      %v465 = vld [vmem:[%s2 + $0x540] sm:$0xff]
      %v466 = vld [vmem:[%s2 + $0x548] sm:$0xff]
      %v467 = vld [vmem:[%s2 + $0x550] sm:$0xff]
      %v468 = vld [vmem:[%s2 + $0x558] sm:$0xff]
      %v469 = vld [vmem:[%s2 + $0x560] sm:$0xff]
      %v470 = vld [vmem:[%s2 + $0x568] sm:$0xff]
      %v471 = vld [vmem:[%s2 + $0x570] sm:$0xff]
      %v472 = vld [vmem:[%s2 + $0x578] sm:$0xff]
      %v473 = vld [vmem:[%s2 + $0x580] sm:$0xff]
      %v474 = vld [vmem:[%s2 + $0x588] sm:$0xff]
      %v475 = vld [vmem:[%s2 + $0x590] sm:$0xff]
      %v476 = vld [vmem:[%s2 + $0x598] sm:$0xff]
      %v477 = vld [vmem:[%s2 + $0x5a0] sm:$0xff]
      %v478 = vld [vmem:[%s2 + $0x5a8] sm:$0xff]
      %v479 = vld [vmem:[%s2 + $0x5b0] sm:$0xff]
      %v480 = vld [vmem:[%s2 + $0x5b8] sm:$0xff]
      %v481 = vld [vmem:[%s2 + $0x5c0] sm:$0xff]
      %v482 = vld [vmem:[%s2 + $0x5c8] sm:$0xff]
      %v483 = vld [vmem:[%s2 + $0x5d0] sm:$0xff]
      %v484 = vld [vmem:[%s2 + $0x5d8] sm:$0xff]
      %v485 = vld [vmem:[%s2 + $0x5e0] sm:$0xff]
      %v486 = vld [vmem:[%s2 + $0x5e8] sm:$0xff]
      %v487 = vld [vmem:[%s2 + $0x5f0] sm:$0xff]
      %v488 = vld [vmem:[%s2 + $0x5f8] sm:$0xff]
      %v489 = vld [vmem:[%s2 + $0x600] sm:$0xff]
      %v490 = vld [vmem:[%s2 + $0x608] sm:$0xff]
      %v491 = vld [vmem:[%s2 + $0x610] sm:$0xff]
      %v492 = vld [vmem:[%s2 + $0x618] sm:$0xff]
      %v493 = vld [vmem:[%s2 + $0x620] sm:$0xff]
      %v494 = vld [vmem:[%s2 + $0x628] sm:$0xff]
      %v495 = vld [vmem:[%s2 + $0x630] sm:$0xff]
      %v496 = vld [vmem:[%s2 + $0x638] sm:$0xff]
      %v497 = vld [vmem:[%s2 + $0x640] sm:$0xff]
      %v498 = vld [vmem:[%s2 + $0x648] sm:$0xff]
      %v499 = vld [vmem:[%s2 + $0x650] sm:$0xff]
      %v500 = vld [vmem:[%s2 + $0x658] sm:$0xff]
      %v501 = vld [vmem:[%s2 + $0x660] sm:$0xff]
      %v502 = vld [vmem:[%s2 + $0x668] sm:$0xff]
      %v503 = vld [vmem:[%s2 + $0x670] sm:$0xff]
      %v504 = vld [vmem:[%s2 + $0x678] sm:$0xff]
      %v505 = vld [vmem:[%s2 + $0x680] sm:$0xff]
      %v506 = vld [vmem:[%s2 + $0x688] sm:$0xff]
      %v507 = vld [vmem:[%s2 + $0x690] sm:$0xff]
      %v508 = vld [vmem:[%s2 + $0x698] sm:$0xff]
      %v509 = vld [vmem:[%s2 + $0x6a0] sm:$0xff]
      %v510 = vld [vmem:[%s2 + $0x6a8] sm:$0xff]
      %v511 = vld [vmem:[%s2 + $0x6b0] sm:$0xff]
      %v512 = vld [vmem:[%s2 + $0x6b8] sm:$0xff]
      %v513 = vld [vmem:[%s2 + $0x6c0] sm:$0xff]
      %v514 = vld [vmem:[%s2 + $0x6c8] sm:$0xff]
      %v515 = vld [vmem:[%s2 + $0x6d0] sm:$0xff]
      %v516 = vld [vmem:[%s2 + $0x6d8] sm:$0xff]
      %v517 = vld [vmem:[%s2 + $0x6e0] sm:$0xff]
      %v518 = vld [vmem:[%s2 + $0x6e8] sm:$0xff]
      %v519 = vld [vmem:[%s2 + $0x6f0] sm:$0xff]
      %v520 = vld [vmem:[%s2 + $0x6f8] sm:$0xff]
      %v521 = vld [vmem:[%s2 + $0x700] sm:$0xff]
      %v522 = vld [vmem:[%s2 + $0x708] sm:$0xff]
      %v523 = vld [vmem:[%s2 + $0x710] sm:$0xff]
      %v524 = vld [vmem:[%s2 + $0x718] sm:$0xff]
      %v525 = vld [vmem:[%s2 + $0x720] sm:$0xff]
      %v526 = vld [vmem:[%s2 + $0x728] sm:$0xff]
      %v527 = vld [vmem:[%s2 + $0x730] sm:$0xff]
      %v528 = vld [vmem:[%s2 + $0x738] sm:$0xff]
      %v529 = vld [vmem:[%s2 + $0x740] sm:$0xff]
      %v530 = vld [vmem:[%s2 + $0x748] sm:$0xff]
      %v531 = vld [vmem:[%s2 + $0x750] sm:$0xff]
      %v532 = vld [vmem:[%s2 + $0x758] sm:$0xff]
      %v533 = vld [vmem:[%s2 + $0x760] sm:$0xff]
      %v534 = vld [vmem:[%s2 + $0x768] sm:$0xff]
      %v535 = vld [vmem:[%s2 + $0x770] sm:$0xff]
      %v536 = vld [vmem:[%s2 + $0x778] sm:$0xff]
      %v537 = vld [vmem:[%s2 + $0x780] sm:$0xff]
      %v538 = vld [vmem:[%s2 + $0x788] sm:$0xff]
      %v539 = vld [vmem:[%s2 + $0x790] sm:$0xff]
      %v540 = vld [vmem:[%s2 + $0x798] sm:$0xff]
      %v541 = vld [vmem:[%s2 + $0x7a0] sm:$0xff]
      %v542 = vld [vmem:[%s2 + $0x7a8] sm:$0xff]
      %v543 = vld [vmem:[%s2 + $0x7b0] sm:$0xff]
      %v544 = vld [vmem:[%s2 + $0x7b8] sm:$0xff]
      %v545 = vld [vmem:[%s2 + $0x7c0] sm:$0xff]
      %v546 = vld [vmem:[%s2 + $0x7c8] sm:$0xff]
      %v547 = vld [vmem:[%s2 + $0x7d0] sm:$0xff]
      %v548 = vld [vmem:[%s2 + $0x7d8] sm:$0xff]
      %v549 = vld [vmem:[%s2 + $0x7e0] sm:$0xff]
      %v550 = vld [vmem:[%s2 + $0x7e8] sm:$0xff]
      %v551 = vld [vmem:[%s2 + $0x7f0] sm:$0xff]
      %v552 = vld [vmem:[%s2 + $0x7f8] sm:$0xff]
      %v553 = vld [vmem:[%s2 + $0x800] sm:$0xff]
      %v554 = vld [vmem:[%s2 + $0x808] sm:$0xff]
      %v555 = vld [vmem:[%s2 + $0x810] sm:$0xff]
      %v556 = vld [vmem:[%s2 + $0x818] sm:$0xff]
      %v557 = vld [vmem:[%s2 + $0x820] sm:$0xff]
      %v558 = vld [vmem:[%s2 + $0x828] sm:$0xff]
      %v559 = vld [vmem:[%s2 + $0x830] sm:$0xff]
      %v560 = vld [vmem:[%s2 + $0x838] sm:$0xff]
      %v561 = vld [vmem:[%s2 + $0x840] sm:$0xff]
      %v562 = vld [vmem:[%s2 + $0x848] sm:$0xff]
      %v563 = vld [vmem:[%s2 + $0x850] sm:$0xff]
      %v564 = vld [vmem:[%s2 + $0x858] sm:$0xff]
      %v565 = vld [vmem:[%s2 + $0x860] sm:$0xff]
      %v566 = vld [vmem:[%s2 + $0x868] sm:$0xff]
      %v567 = vld [vmem:[%s2 + $0x870] sm:$0xff]
      %v568 = vld [vmem:[%s2 + $0x878] sm:$0xff]
      %v569 = vld [vmem:[%s2 + $0x880] sm:$0xff]
      %v570 = vld [vmem:[%s2 + $0x888] sm:$0xff]
      %v571 = vld [vmem:[%s2 + $0x890] sm:$0xff]
      %v572 = vld [vmem:[%s2 + $0x898] sm:$0xff]
      %v573 = vld [vmem:[%s2 + $0x8a0] sm:$0xff]
      %v574 = vld [vmem:[%s2 + $0x8a8] sm:$0xff]
      %v575 = vld [vmem:[%s2 + $0x8b0] sm:$0xff]
      %v576 = vld [vmem:[%s2 + $0x8b8] sm:$0xff]
      %v577 = vld [vmem:[%s2 + $0x8c0] sm:$0xff]
      %v578 = vld [vmem:[%s2 + $0x8c8] sm:$0xff]
      %v579 = vld [vmem:[%s2 + $0x8d0] sm:$0xff]
      %v580 = vld [vmem:[%s2 + $0x8d8] sm:$0xff]
      %v581 = vld [vmem:[%s2 + $0x8e0] sm:$0xff]
      %v582 = vld [vmem:[%s2 + $0x8e8] sm:$0xff]
      %v583 = vld [vmem:[%s2 + $0x8f0] sm:$0xff]
      %v584 = vld [vmem:[%s2 + $0x8f8] sm:$0xff]
      %v585 = vld [vmem:[%s4] sm:$0x7]
      %v587 = vperm.slane %v585, 0
      %v588 = vperm.slane %v585, 1
      %v589 = vperm.slane %v585, 2
      %593 = vmatpush.msra.mxu0 %v342
      %594 = vmatpush.msra.mxu0 %v339
      %595 = vmatpush.msra.mxu0 %v336
      %596 = vmatpush.msra.mxu0 %v333
      %597 = vmatpush.msra.mxu0 %v330
      %598 = vmatpush.msra.mxu0 %v327
      %599 = vmatpush.msra.mxu0 %v324
      %600 = vmatpush.msra.mxu0 %v321
      %601 = vmatpush.msra.mxu0 %v318
      %602 = vmatpush.msra.mxu0 %v315
      %603 = vmatpush.msra.mxu0 %v312
      %604 = vmatpush.msra.mxu0 %v309
      %605 = vmatpush.msra.mxu0 %v306
      %606 = vmatpush.msra.mxu0 %v303
      %607 = vmatpush.msra.mxu0 %v300
      %608 = vmatpush.msra.mxu0 %v297
      %609 = vmatmul.f32.gmra.mxu0 %v245
      %v610 = vpop.f32.mrf.mxu0
      %v611 = vadd.f32 %v587, %v610
      %612 = vmatmul.f32.gmra.mxu0 %v247
      %v613 = vpop.f32.mrf.mxu0
      %v614 = vadd.f32 %v587, %v613
      %615 = vdwg.mxu0
      %616 = vmatpush.msra.mxu0 %v390
      %617 = vmatpush.msra.mxu0 %v387
      %618 = vmatpush.msra.mxu0 %v384
      %619 = vmatpush.msra.mxu0 %v381
      %620 = vmatpush.msra.mxu0 %v378
      %621 = vmatpush.msra.mxu0 %v375
      %622 = vmatpush.msra.mxu0 %v372
      %623 = vmatpush.msra.mxu0 %v369
      %624 = vmatpush.msra.mxu0 %v366
      %625 = vmatpush.msra.mxu0 %v363
      %626 = vmatpush.msra.mxu0 %v360
      %627 = vmatpush.msra.mxu0 %v357
      %628 = vmatpush.msra.mxu0 %v354
      %629 = vmatpush.msra.mxu0 %v351
      %630 = vmatpush.msra.mxu0 %v348
      %631 = vmatpush.msra.mxu0 %v345
      %632 = vmatmul.f32.gmra.mxu0 %v246
      %v633 = vpop.f32.mrf.mxu0
      %v634 = vadd.f32 %v611, %v633
      %635 = vmatmul.f32.gmra.mxu0 %v248
      %v636 = vpop.f32.mrf.mxu0
      %v637 = vadd.f32 %v614, %v636
      %638 = vdwg.mxu0
      %639 = vmatpush.msra.mxu0 %v438
      %640 = vmatpush.msra.mxu0 %v435
      %641 = vmatpush.msra.mxu0 %v432
      %642 = vmatpush.msra.mxu0 %v429
      %643 = vmatpush.msra.mxu0 %v426
      %644 = vmatpush.msra.mxu0 %v423
      %645 = vmatpush.msra.mxu0 %v420
      %646 = vmatpush.msra.mxu0 %v417
      %647 = vmatpush.msra.mxu0 %v414
      %648 = vmatpush.msra.mxu0 %v411
      %649 = vmatpush.msra.mxu0 %v408
      %650 = vmatpush.msra.mxu0 %v405
      %651 = vmatpush.msra.mxu0 %v402
      %652 = vmatpush.msra.mxu0 %v399
      %653 = vmatpush.msra.mxu0 %v396
      %654 = vmatpush.msra.mxu0 %v393
      %655 = vmatmul.f32.gmra.mxu0 %v266
      %v656 = vpop.f32.mrf.mxu0
      %v657 = vadd.f32 %v634, %v656
      %658 = vmatmul.f32.gmra.mxu0 %v271
      %v659 = vpop.f32.mrf.mxu0
      %v660 = vadd.f32 %v637, %v659
      %661 = vdwg.mxu0
      %662 = vmatpush.msra.mxu0 %v486
      %663 = vmatpush.msra.mxu0 %v483
      %664 = vmatpush.msra.mxu0 %v480
      %665 = vmatpush.msra.mxu0 %v477
      %666 = vmatpush.msra.mxu0 %v474
      %667 = vmatpush.msra.mxu0 %v471
      %668 = vmatpush.msra.mxu0 %v468
      %669 = vmatpush.msra.mxu0 %v465
      %670 = vmatpush.msra.mxu0 %v462
      %671 = vmatpush.msra.mxu0 %v459
      %672 = vmatpush.msra.mxu0 %v456
      %673 = vmatpush.msra.mxu0 %v453
      %674 = vmatpush.msra.mxu0 %v450
      %675 = vmatpush.msra.mxu0 %v447
      %676 = vmatpush.msra.mxu0 %v444
      %677 = vmatpush.msra.mxu0 %v441
      %678 = vmatmul.f32.gmra.mxu0 %v269
      %v679 = vpop.f32.mrf.mxu0
      %v680 = vadd.f32 %v657, %v679
      %681 = vmatmul.f32.gmra.mxu0 %v273
      %v682 = vpop.f32.mrf.mxu0
      %v683 = vadd.f32 %v660, %v682
      %684 = vdwg.mxu0
      %685 = vmatpush.msra.mxu0 %v534
      %686 = vmatpush.msra.mxu0 %v531
      %687 = vmatpush.msra.mxu0 %v528
      %688 = vmatpush.msra.mxu0 %v525
      %689 = vmatpush.msra.mxu0 %v522
      %690 = vmatpush.msra.mxu0 %v519
      %691 = vmatpush.msra.mxu0 %v516
      %692 = vmatpush.msra.mxu0 %v513
      %693 = vmatpush.msra.mxu0 %v510
      %694 = vmatpush.msra.mxu0 %v507
      %695 = vmatpush.msra.mxu0 %v504
      %696 = vmatpush.msra.mxu0 %v501
      %697 = vmatpush.msra.mxu0 %v498
      %698 = vmatpush.msra.mxu0 %v495
      %699 = vmatpush.msra.mxu0 %v492
      %700 = vmatpush.msra.mxu0 %v489
      %701 = vmatmul.f32.gmra.mxu0 %v285
      %v702 = vpop.f32.mrf.mxu0
      %v703 = vadd.f32 %v680, %v702
      %704 = vmatmul.f32.gmra.mxu0 %v290
      %v705 = vpop.f32.mrf.mxu0
      %v706 = vadd.f32 %v683, %v705
      %707 = vdwg.mxu0
      %708 = vmatpush.msra.mxu0 %v582
      %709 = vmatpush.msra.mxu0 %v579
      %710 = vmatpush.msra.mxu0 %v576
      %711 = vmatpush.msra.mxu0 %v573
      %712 = vmatpush.msra.mxu0 %v570
      %713 = vmatpush.msra.mxu0 %v567
      %714 = vmatpush.msra.mxu0 %v564
      %715 = vmatpush.msra.mxu0 %v561
      %716 = vmatpush.msra.mxu0 %v558
      %717 = vmatpush.msra.mxu0 %v555
      %718 = vmatpush.msra.mxu0 %v552
      %719 = vmatpush.msra.mxu0 %v549
      %720 = vmatpush.msra.mxu0 %v546
      %721 = vmatpush.msra.mxu0 %v543
      %722 = vmatpush.msra.mxu0 %v540
      %723 = vmatpush.msra.mxu0 %v537
      %724 = vmatmul.f32.gmra.mxu0 %v288
      %v725 = vpop.f32.mrf.mxu0
      %v726 = vadd.f32 %v703, %v725
      %727 = vmatmul.f32.gmra.mxu0 %v292
      %v728 = vpop.f32.mrf.mxu0
      %v729 = vadd.f32 %v706, %v728
      %730 = vdwg.mxu0
      %731 = vmatpush.msra.mxu0 %v343
      %732 = vmatpush.msra.mxu0 %v340
      %733 = vmatpush.msra.mxu0 %v337
      %734 = vmatpush.msra.mxu0 %v334
      %735 = vmatpush.msra.mxu0 %v331
      %736 = vmatpush.msra.mxu0 %v328
      %737 = vmatpush.msra.mxu0 %v325
      %738 = vmatpush.msra.mxu0 %v322
      %739 = vmatpush.msra.mxu0 %v319
      %740 = vmatpush.msra.mxu0 %v316
      %741 = vmatpush.msra.mxu0 %v313
      %742 = vmatpush.msra.mxu0 %v310
      %743 = vmatpush.msra.mxu0 %v307
      %744 = vmatpush.msra.mxu0 %v304
      %745 = vmatpush.msra.mxu0 %v301
      %746 = vmatpush.msra.mxu0 %v298
      %747 = vmatmul.f32.gmra.mxu0 %v245
      %v748 = vpop.f32.mrf.mxu0
      %v749 = vadd.f32 %v588, %v748
      %750 = vmatmul.f32.gmra.mxu0 %v247
      %v751 = vpop.f32.mrf.mxu0
      %v752 = vadd.f32 %v588, %v751
      %753 = vdwg.mxu0
      %754 = vmatpush.msra.mxu0 %v391
      %755 = vmatpush.msra.mxu0 %v388
      %756 = vmatpush.msra.mxu0 %v385
      %757 = vmatpush.msra.mxu0 %v382
      %758 = vmatpush.msra.mxu0 %v379
      %759 = vmatpush.msra.mxu0 %v376
      %760 = vmatpush.msra.mxu0 %v373
      %761 = vmatpush.msra.mxu0 %v370
      %762 = vmatpush.msra.mxu0 %v367
      %763 = vmatpush.msra.mxu0 %v364
      %764 = vmatpush.msra.mxu0 %v361
      %765 = vmatpush.msra.mxu0 %v358
      %766 = vmatpush.msra.mxu0 %v355
      %767 = vmatpush.msra.mxu0 %v352
      %768 = vmatpush.msra.mxu0 %v349
      %769 = vmatpush.msra.mxu0 %v346
      %770 = vmatmul.f32.gmra.mxu0 %v246
      %v771 = vpop.f32.mrf.mxu0
      %v772 = vadd.f32 %v749, %v771
      %773 = vmatmul.f32.gmra.mxu0 %v248
      %v774 = vpop.f32.mrf.mxu0
      %v775 = vadd.f32 %v752, %v774
      %776 = vdwg.mxu0
      %777 = vmatpush.msra.mxu0 %v439
      %778 = vmatpush.msra.mxu0 %v436
      %779 = vmatpush.msra.mxu0 %v433
      %780 = vmatpush.msra.mxu0 %v430
      %781 = vmatpush.msra.mxu0 %v427
      %782 = vmatpush.msra.mxu0 %v424
      %783 = vmatpush.msra.mxu0 %v421
      %784 = vmatpush.msra.mxu0 %v418
      %785 = vmatpush.msra.mxu0 %v415
      %786 = vmatpush.msra.mxu0 %v412
      %787 = vmatpush.msra.mxu0 %v409
      %788 = vmatpush.msra.mxu0 %v406
      %789 = vmatpush.msra.mxu0 %v403
      %790 = vmatpush.msra.mxu0 %v400
      %791 = vmatpush.msra.mxu0 %v397
      %792 = vmatpush.msra.mxu0 %v394
      %793 = vmatmul.f32.gmra.mxu0 %v266
      %v794 = vpop.f32.mrf.mxu0
      %v795 = vadd.f32 %v772, %v794
      %796 = vmatmul.f32.gmra.mxu0 %v271
      %v797 = vpop.f32.mrf.mxu0
      %v798 = vadd.f32 %v775, %v797
      %799 = vdwg.mxu0
      %800 = vmatpush.msra.mxu0 %v487
      %801 = vmatpush.msra.mxu0 %v484
      %802 = vmatpush.msra.mxu0 %v481
      %803 = vmatpush.msra.mxu0 %v478
      %804 = vmatpush.msra.mxu0 %v475
      %805 = vmatpush.msra.mxu0 %v472
      %806 = vmatpush.msra.mxu0 %v469
      %807 = vmatpush.msra.mxu0 %v466
      %808 = vmatpush.msra.mxu0 %v463
      %809 = vmatpush.msra.mxu0 %v460
      %810 = vmatpush.msra.mxu0 %v457
      %811 = vmatpush.msra.mxu0 %v454
      %812 = vmatpush.msra.mxu0 %v451
      %813 = vmatpush.msra.mxu0 %v448
      %814 = vmatpush.msra.mxu0 %v445
      %815 = vmatpush.msra.mxu0 %v442
      %816 = vmatmul.f32.gmra.mxu0 %v269
      %v817 = vpop.f32.mrf.mxu0
      %v818 = vadd.f32 %v795, %v817
      %819 = vmatmul.f32.gmra.mxu0 %v273
      %v820 = vpop.f32.mrf.mxu0
      %v821 = vadd.f32 %v798, %v820
      %822 = vdwg.mxu0
      %823 = vmatpush.msra.mxu0 %v535
      %824 = vmatpush.msra.mxu0 %v532
      %825 = vmatpush.msra.mxu0 %v529
      %826 = vmatpush.msra.mxu0 %v526
      %827 = vmatpush.msra.mxu0 %v523
      %828 = vmatpush.msra.mxu0 %v520
      %829 = vmatpush.msra.mxu0 %v517
      %830 = vmatpush.msra.mxu0 %v514
      %831 = vmatpush.msra.mxu0 %v511
      %832 = vmatpush.msra.mxu0 %v508
      %833 = vmatpush.msra.mxu0 %v505
      %834 = vmatpush.msra.mxu0 %v502
      %835 = vmatpush.msra.mxu0 %v499
      %836 = vmatpush.msra.mxu0 %v496
      %837 = vmatpush.msra.mxu0 %v493
      %838 = vmatpush.msra.mxu0 %v490
      %839 = vmatmul.f32.gmra.mxu0 %v285
      %v840 = vpop.f32.mrf.mxu0
      %v841 = vadd.f32 %v818, %v840
      %842 = vmatmul.f32.gmra.mxu0 %v290
      %v843 = vpop.f32.mrf.mxu0
      %v844 = vadd.f32 %v821, %v843
      %845 = vdwg.mxu0
      %846 = vmatpush.msra.mxu0 %v583
      %847 = vmatpush.msra.mxu0 %v580
      %848 = vmatpush.msra.mxu0 %v577
      %849 = vmatpush.msra.mxu0 %v574
      %850 = vmatpush.msra.mxu0 %v571
      %851 = vmatpush.msra.mxu0 %v568
      %852 = vmatpush.msra.mxu0 %v565
      %853 = vmatpush.msra.mxu0 %v562
      %854 = vmatpush.msra.mxu0 %v559
      %855 = vmatpush.msra.mxu0 %v556
      %856 = vmatpush.msra.mxu0 %v553
      %857 = vmatpush.msra.mxu0 %v550
      %858 = vmatpush.msra.mxu0 %v547
      %859 = vmatpush.msra.mxu0 %v544
      %860 = vmatpush.msra.mxu0 %v541
      %861 = vmatpush.msra.mxu0 %v538
      %862 = vmatmul.f32.gmra.mxu0 %v288
      %v863 = vpop.f32.mrf.mxu0
      %v864 = vadd.f32 %v841, %v863
      %865 = vmatmul.f32.gmra.mxu0 %v292
      %v866 = vpop.f32.mrf.mxu0
      %v867 = vadd.f32 %v844, %v866
      %868 = vdwg.mxu0
      %869 = vmatpush.msra.mxu0 %v344
      %870 = vmatpush.msra.mxu0 %v341
      %871 = vmatpush.msra.mxu0 %v338
      %872 = vmatpush.msra.mxu0 %v335
      %873 = vmatpush.msra.mxu0 %v332
      %874 = vmatpush.msra.mxu0 %v329
      %875 = vmatpush.msra.mxu0 %v326
      %876 = vmatpush.msra.mxu0 %v323
      %877 = vmatpush.msra.mxu0 %v320
      %878 = vmatpush.msra.mxu0 %v317
      %879 = vmatpush.msra.mxu0 %v314
      %880 = vmatpush.msra.mxu0 %v311
      %881 = vmatpush.msra.mxu0 %v308
      %882 = vmatpush.msra.mxu0 %v305
      %883 = vmatpush.msra.mxu0 %v302
      %884 = vmatpush.msra.mxu0 %v299
      %885 = vmatmul.f32.gmra.mxu0 %v245
      %v886 = vpop.f32.mrf.mxu0
      %v887 = vadd.f32 %v589, %v886
      %888 = vmatmul.f32.gmra.mxu0 %v247
      %v889 = vpop.f32.mrf.mxu0
      %v890 = vadd.f32 %v589, %v889
      %891 = vdwg.mxu0
      %892 = vmatpush.msra.mxu0 %v392
      %893 = vmatpush.msra.mxu0 %v389
      %894 = vmatpush.msra.mxu0 %v386
      %895 = vmatpush.msra.mxu0 %v383
      %896 = vmatpush.msra.mxu0 %v380
      %897 = vmatpush.msra.mxu0 %v377
      %898 = vmatpush.msra.mxu0 %v374
      %899 = vmatpush.msra.mxu0 %v371
      %900 = vmatpush.msra.mxu0 %v368
      %901 = vmatpush.msra.mxu0 %v365
      %902 = vmatpush.msra.mxu0 %v362
      %903 = vmatpush.msra.mxu0 %v359
      %904 = vmatpush.msra.mxu0 %v356
      %905 = vmatpush.msra.mxu0 %v353
      %906 = vmatpush.msra.mxu0 %v350
      %907 = vmatpush.msra.mxu0 %v347
      %908 = vmatmul.f32.gmra.mxu0 %v246
      %v909 = vpop.f32.mrf.mxu0
      %v910 = vadd.f32 %v887, %v909
      %911 = vmatmul.f32.gmra.mxu0 %v248
      %v912 = vpop.f32.mrf.mxu0
      %v913 = vadd.f32 %v890, %v912
      %914 = vdwg.mxu0
      %915 = vmatpush.msra.mxu0 %v440
      %916 = vmatpush.msra.mxu0 %v437
      %917 = vmatpush.msra.mxu0 %v434
      %918 = vmatpush.msra.mxu0 %v431
      %919 = vmatpush.msra.mxu0 %v428
      %920 = vmatpush.msra.mxu0 %v425
      %921 = vmatpush.msra.mxu0 %v422
      %922 = vmatpush.msra.mxu0 %v419
      %923 = vmatpush.msra.mxu0 %v416
      %924 = vmatpush.msra.mxu0 %v413
      %925 = vmatpush.msra.mxu0 %v410
      %926 = vmatpush.msra.mxu0 %v407
      %927 = vmatpush.msra.mxu0 %v404
      %928 = vmatpush.msra.mxu0 %v401
      %929 = vmatpush.msra.mxu0 %v398
      %930 = vmatpush.msra.mxu0 %v395
      %931 = vmatmul.f32.gmra.mxu0 %v266
      %v932 = vpop.f32.mrf.mxu0
      %v933 = vadd.f32 %v910, %v932
      %934 = vmatmul.f32.gmra.mxu0 %v271
      %v935 = vpop.f32.mrf.mxu0
      %v936 = vadd.f32 %v913, %v935
      %937 = vdwg.mxu0
      %938 = vmatpush.msra.mxu0 %v488
      %939 = vmatpush.msra.mxu0 %v485
      %940 = vmatpush.msra.mxu0 %v482
      %941 = vmatpush.msra.mxu0 %v479
      %942 = vmatpush.msra.mxu0 %v476
      %943 = vmatpush.msra.mxu0 %v473
      %944 = vmatpush.msra.mxu0 %v470
      %945 = vmatpush.msra.mxu0 %v467
      %946 = vmatpush.msra.mxu0 %v464
      %947 = vmatpush.msra.mxu0 %v461
      %948 = vmatpush.msra.mxu0 %v458
      %949 = vmatpush.msra.mxu0 %v455
      %950 = vmatpush.msra.mxu0 %v452
      %951 = vmatpush.msra.mxu0 %v449
      %952 = vmatpush.msra.mxu0 %v446
      %953 = vmatpush.msra.mxu0 %v443
      %954 = vmatmul.f32.gmra.mxu0 %v269
      %v955 = vpop.f32.mrf.mxu0
      %v956 = vadd.f32 %v933, %v955
      %957 = vmatmul.f32.gmra.mxu0 %v273
      %v958 = vpop.f32.mrf.mxu0
      %v959 = vadd.f32 %v936, %v958
      %960 = vdwg.mxu0
      %961 = vmatpush.msra.mxu0 %v536
      %962 = vmatpush.msra.mxu0 %v533
      %963 = vmatpush.msra.mxu0 %v530
      %964 = vmatpush.msra.mxu0 %v527
      %965 = vmatpush.msra.mxu0 %v524
      %966 = vmatpush.msra.mxu0 %v521
      %967 = vmatpush.msra.mxu0 %v518
      %968 = vmatpush.msra.mxu0 %v515
      %969 = vmatpush.msra.mxu0 %v512
      %970 = vmatpush.msra.mxu0 %v509
      %971 = vmatpush.msra.mxu0 %v506
      %972 = vmatpush.msra.mxu0 %v503
      %973 = vmatpush.msra.mxu0 %v500
      %974 = vmatpush.msra.mxu0 %v497
      %975 = vmatpush.msra.mxu0 %v494
      %976 = vmatpush.msra.mxu0 %v491
      %977 = vmatmul.f32.gmra.mxu0 %v285
      %v978 = vpop.f32.mrf.mxu0
      %v979 = vadd.f32 %v956, %v978
      %980 = vmatmul.f32.gmra.mxu0 %v290
      %v981 = vpop.f32.mrf.mxu0
      %v982 = vadd.f32 %v959, %v981
      %983 = vdwg.mxu0
      %984 = vmatpush.msra.mxu0 %v584
      %985 = vmatpush.msra.mxu0 %v581
      %986 = vmatpush.msra.mxu0 %v578
      %987 = vmatpush.msra.mxu0 %v575
      %988 = vmatpush.msra.mxu0 %v572
      %989 = vmatpush.msra.mxu0 %v569
      %990 = vmatpush.msra.mxu0 %v566
      %991 = vmatpush.msra.mxu0 %v563
      %992 = vmatpush.msra.mxu0 %v560
      %993 = vmatpush.msra.mxu0 %v557
      %994 = vmatpush.msra.mxu0 %v554
      %995 = vmatpush.msra.mxu0 %v551
      %996 = vmatpush.msra.mxu0 %v548
      %997 = vmatpush.msra.mxu0 %v545
      %998 = vmatpush.msra.mxu0 %v542
      %999 = vmatpush.msra.mxu0 %v539
      %1000 = vmatmul.f32.gmra.mxu0 %v288
      %v1001 = vpop.f32.mrf.mxu0
      %v1002 = vadd.f32 %v979, %v1001
      %1003 = vmatmul.f32.gmra.mxu0 %v292
      %v1004 = vpop.f32.mrf.mxu0
      %v1005 = vadd.f32 %v982, %v1004
      %1006 = vdwg.mxu0
      %v1007 = vxor.u32 %v726, 2147483648
      %v1008 = vxor.u32 %v729, 2147483648
      %v1009 = vmul.f32 %v1007, 1.442695
      %v1010 = vpow.pop %v1009
      %v1011 = vmul.f32 %v1008, 1.442695
      %v1012 = vpow.pop %v1011
      %v1013 = vadd.f32 %v1010, 1.0
      %v1014 = vadd.f32 %v1012, 1.0
      %v1015 = vrcp.pop %v1013
      %v1016 = vmul.f32 %v1013, %v1015
      %v1017 = vsub.f32 1.0, %v1016
      %v1018 = vmul.f32 %v1015, %v1017
      %v1019 = vadd.f32 %v1015, %v1018
      %vm1020 = vweird.f32 %v1013
      %vm1021 = vweird.f32 %v1015
      %vm1022 = vmor %vm1020, %vm1021
      %v1023 = vsel %vm1022, %v1015, %v1019
      %v1024 = vand.u32 2147483647, %v1013
      %vm1025 = vcmp.eq.f32.partialorder %v1024, 8.507059e+37
      %v1026 = vand.u32 %v1013, 2147483648
      %v1027 = vor.u32 1.1754944e-38, %v1026
      %v1028 = vsel %vm1025, %v1027, %v1023
      %v1029 = vmul.f32 1.0, %v1028
      %v1030 = vrcp.pop %v1014
      %v1031 = vmul.f32 %v1014, %v1030
      %v1032 = vsub.f32 1.0, %v1031
      %v1033 = vmul.f32 %v1030, %v1032
      %v1034 = vadd.f32 %v1030, %v1033
      %vm1035 = vweird.f32 %v1014
      %vm1036 = vweird.f32 %v1030
      %vm1037 = vmor %vm1035, %vm1036
      %v1038 = vsel %vm1037, %v1030, %v1034
      %v1039 = vand.u32 2147483647, %v1014
      %vm1040 = vcmp.eq.f32.partialorder %v1039, 8.507059e+37
      %v1041 = vand.u32 %v1014, 2147483648
      %v1042 = vor.u32 1.1754944e-38, %v1041
      %v1043 = vsel %vm1040, %v1042, %v1038
      %v1044 = vmul.f32 1.0, %v1043
      %v1045 = vxor.u32 %v864, 2147483648
      %v1046 = vxor.u32 %v867, 2147483648
      %v1047 = vmul.f32 %v1045, 1.442695
      %v1048 = vpow.pop %v1047
      %v1049 = vmul.f32 %v1046, 1.442695
      %v1050 = vpow.pop %v1049
      %v1051 = vadd.f32 %v1048, 1.0
      %v1052 = vadd.f32 %v1050, 1.0
      %v1053 = vrcp.pop %v1051
      %v1054 = vmul.f32 %v1051, %v1053
      %v1055 = vsub.f32 1.0, %v1054
      %v1056 = vmul.f32 %v1053, %v1055
      %v1057 = vadd.f32 %v1053, %v1056
      %vm1058 = vweird.f32 %v1051
      %vm1059 = vweird.f32 %v1053
      %vm1060 = vmor %vm1058, %vm1059
      %v1061 = vsel %vm1060, %v1053, %v1057
      %v1062 = vand.u32 2147483647, %v1051
      %vm1063 = vcmp.eq.f32.partialorder %v1062, 8.507059e+37
      %v1064 = vand.u32 %v1051, 2147483648
      %v1065 = vor.u32 1.1754944e-38, %v1064
      %v1066 = vsel %vm1063, %v1065, %v1061
      %v1067 = vmul.f32 1.0, %v1066
      %v1068 = vrcp.pop %v1052
      %v1069 = vmul.f32 %v1052, %v1068
      %v1070 = vsub.f32 1.0, %v1069
      %v1071 = vmul.f32 %v1068, %v1070
      %v1072 = vadd.f32 %v1068, %v1071
      %vm1073 = vweird.f32 %v1052
      %vm1074 = vweird.f32 %v1068
      %vm1075 = vmor %vm1073, %vm1074
      %v1076 = vsel %vm1075, %v1068, %v1072
      %v1077 = vand.u32 2147483647, %v1052
      %vm1078 = vcmp.eq.f32.partialorder %v1077, 8.507059e+37
      %v1079 = vand.u32 %v1052, 2147483648
      %v1080 = vor.u32 1.1754944e-38, %v1079
      %v1081 = vsel %vm1078, %v1080, %v1076
      %v1082 = vmul.f32 1.0, %v1081
      %v1083 = vld [vmem:[%s239] sm:$0xff]
      %v1084 = vld [vmem:[%s239 + $0x8] sm:$0xff]
      %v1085 = vmul.f32 %v1083, %v1067
      %v1086 = vmul.f32 %v1084, %v1082
      %vm1089 = vcmask 1040384
      %v1090 = vrot.slane %v1085, 7
      %v1091 = vrot.slane %v1086, 7
      %v1092 = vsel %vm1089, %v1090, %v1091
      %v1095 = vsel %vm1089, 0.0, %v1090
      %v1096 = vrot.slane %v1085, 1
      %v1097 = vrot.slane %v1086, 1
      %v1098 = vsel %vm263, %v1096, %v1097
      %v1101 = vsel %vm263, %v1097, 0.0
      %v1102 = vld [vmem:[%s3] sm:$0xff]
      %v1103 = vld [vmem:[%s3 + $0x8] sm:$0xff]
      %v1104 = vld [vmem:[%s3 + $0x10] sm:$0xff]
      %v1105 = vld [vmem:[%s3 + $0x18] sm:$0xff]
      %v1106 = vld [vmem:[%s3 + $0x20] sm:$0xff]
      %v1107 = vld [vmem:[%s3 + $0x28] sm:$0xff]
      %v1108 = vld [vmem:[%s3 + $0x30] sm:$0xff]
      %v1109 = vld [vmem:[%s3 + $0x38] sm:$0xff]
      %v1110 = vld [vmem:[%s3 + $0x40] sm:$0xff]
      %v1111 = vld [vmem:[%s3 + $0x48] sm:$0xff]
      %v1112 = vld [vmem:[%s3 + $0x50] sm:$0xff]
      %v1113 = vld [vmem:[%s3 + $0x58] sm:$0xff]
      %v1114 = vld [vmem:[%s3 + $0x60] sm:$0xff]
      %v1115 = vld [vmem:[%s3 + $0x68] sm:$0xff]
      %v1116 = vld [vmem:[%s3 + $0x70] sm:$0xff]
      %v1117 = vld [vmem:[%s3 + $0x78] sm:$0xff]
      %v1118 = vld [vmem:[%s3 + $0x80] sm:$0xff]
      %v1119 = vld [vmem:[%s3 + $0x88] sm:$0xff]
      %v1120 = vld [vmem:[%s3 + $0x90] sm:$0xff]
      %v1121 = vld [vmem:[%s3 + $0x98] sm:$0xff]
      %v1122 = vld [vmem:[%s3 + $0xa0] sm:$0xff]
      %v1123 = vld [vmem:[%s3 + $0xa8] sm:$0xff]
      %v1124 = vld [vmem:[%s3 + $0xb0] sm:$0xff]
      %v1125 = vld [vmem:[%s3 + $0xb8] sm:$0xff]
      %v1126 = vld [vmem:[%s3 + $0xc0] sm:$0xff]
      %v1127 = vld [vmem:[%s3 + $0xc8] sm:$0xff]
      %v1128 = vld [vmem:[%s3 + $0xd0] sm:$0xff]
      %v1129 = vld [vmem:[%s3 + $0xd8] sm:$0xff]
      %v1130 = vld [vmem:[%s3 + $0xe0] sm:$0xff]
      %v1131 = vld [vmem:[%s3 + $0xe8] sm:$0xff]
      %v1132 = vld [vmem:[%s3 + $0xf0] sm:$0xff]
      %v1133 = vld [vmem:[%s3 + $0xf8] sm:$0xff]
      %v1134 = vld [vmem:[%s3 + $0x100] sm:$0xff]
      %v1135 = vld [vmem:[%s3 + $0x108] sm:$0xff]
      %v1136 = vld [vmem:[%s3 + $0x110] sm:$0xff]
      %v1137 = vld [vmem:[%s3 + $0x118] sm:$0xff]
      %v1138 = vld [vmem:[%s3 + $0x120] sm:$0xff]
      %v1139 = vld [vmem:[%s3 + $0x128] sm:$0xff]
      %v1140 = vld [vmem:[%s3 + $0x130] sm:$0xff]
      %v1141 = vld [vmem:[%s3 + $0x138] sm:$0xff]
      %v1142 = vld [vmem:[%s3 + $0x140] sm:$0xff]
      %v1143 = vld [vmem:[%s3 + $0x148] sm:$0xff]
      %v1144 = vld [vmem:[%s3 + $0x150] sm:$0xff]
      %v1145 = vld [vmem:[%s3 + $0x158] sm:$0xff]
      %v1146 = vld [vmem:[%s3 + $0x160] sm:$0xff]
      %v1147 = vld [vmem:[%s3 + $0x168] sm:$0xff]
      %v1148 = vld [vmem:[%s3 + $0x170] sm:$0xff]
      %v1149 = vld [vmem:[%s3 + $0x178] sm:$0xff]
      %1150 = vmatpush.msra.mxu0 %v1117
      %1151 = vmatpush.msra.mxu0 %v1116
      %1152 = vmatpush.msra.mxu0 %v1115
      %1153 = vmatpush.msra.mxu0 %v1114
      %1154 = vmatpush.msra.mxu0 %v1113
      %1155 = vmatpush.msra.mxu0 %v1112
      %1156 = vmatpush.msra.mxu0 %v1111
      %1157 = vmatpush.msra.mxu0 %v1110
      %1158 = vmatpush.msra.mxu0 %v1109
      %1159 = vmatpush.msra.mxu0 %v1108
      %1160 = vmatpush.msra.mxu0 %v1107
      %1161 = vmatpush.msra.mxu0 %v1106
      %1162 = vmatpush.msra.mxu0 %v1105
      %1163 = vmatpush.msra.mxu0 %v1104
      %1164 = vmatpush.msra.mxu0 %v1103
      %1165 = vmatpush.msra.mxu0 %v1102
      %1166 = vmatmul.f32.gmra.mxu0 %v1095
      %v1167 = vpop.f32.mrf.mxu0
      %v1168 = vadd.f32 0.0, %v1167
      %1169 = vmatmul.f32.gmra.mxu0 %v1092
      %v1170 = vpop.f32.mrf.mxu0
      %v1171 = vadd.f32 0.0, %v1170
      %1172 = vdwg.mxu0
      %1173 = vmatpush.msra.mxu0 %v1133
      %1174 = vmatpush.msra.mxu0 %v1132
      %1175 = vmatpush.msra.mxu0 %v1131
      %1176 = vmatpush.msra.mxu0 %v1130
      %1177 = vmatpush.msra.mxu0 %v1129
      %1178 = vmatpush.msra.mxu0 %v1128
      %1179 = vmatpush.msra.mxu0 %v1127
      %1180 = vmatpush.msra.mxu0 %v1126
      %1181 = vmatpush.msra.mxu0 %v1125
      %1182 = vmatpush.msra.mxu0 %v1124
      %1183 = vmatpush.msra.mxu0 %v1123
      %1184 = vmatpush.msra.mxu0 %v1122
      %1185 = vmatpush.msra.mxu0 %v1121
      %1186 = vmatpush.msra.mxu0 %v1120
      %1187 = vmatpush.msra.mxu0 %v1119
      %1188 = vmatpush.msra.mxu0 %v1118
      %1189 = vmatmul.f32.gmra.mxu0 %v1085
      %v1190 = vpop.f32.mrf.mxu0
      %v1191 = vadd.f32 %v1168, %v1190
      %1192 = vmatmul.f32.gmra.mxu0 %v1086
      %v1193 = vpop.f32.mrf.mxu0
      %v1194 = vadd.f32 %v1171, %v1193
      %1195 = vdwg.mxu0
      %1196 = vmatpush.msra.mxu0 %v1149
      %1197 = vmatpush.msra.mxu0 %v1148
      %1198 = vmatpush.msra.mxu0 %v1147
      %1199 = vmatpush.msra.mxu0 %v1146
      %1200 = vmatpush.msra.mxu0 %v1145
      %1201 = vmatpush.msra.mxu0 %v1144
      %1202 = vmatpush.msra.mxu0 %v1143
      %1203 = vmatpush.msra.mxu0 %v1142
      %1204 = vmatpush.msra.mxu0 %v1141
      %1205 = vmatpush.msra.mxu0 %v1140
      %1206 = vmatpush.msra.mxu0 %v1139
      %1207 = vmatpush.msra.mxu0 %v1138
      %1208 = vmatpush.msra.mxu0 %v1137
      %1209 = vmatpush.msra.mxu0 %v1136
      %1210 = vmatpush.msra.mxu0 %v1135
      %1211 = vmatpush.msra.mxu0 %v1134
      %1212 = vmatmul.f32.gmra.mxu0 %v1098
      %v1213 = vpop.f32.mrf.mxu0
      %v1214 = vadd.f32 %v1191, %v1213
      %1215 = vmatmul.f32.gmra.mxu0 %v1101
      %v1216 = vpop.f32.mrf.mxu0
      %v1217 = vadd.f32 %v1194, %v1216
      %1218 = vdwg.mxu0
      %v1219 = vadd.f32 %v1002, %v1214
      %v1220 = vadd.f32 %v1005, %v1217
      %vm1221 = vcmp.ge.f32.partialorder %v1219, 0.0
      %vm1222 = vcmp.ge.f32.partialorder %v1220, 0.0
      %v1223 = vmul.f32 %v1219, 0.2
      %v1224 = vmul.f32 %v1220, 0.2
      %v1225 = vsel %vm1221, %v1219, %v1223
      %v1226 = vsel %vm1222, %v1220, %v1224
      %v1227 = vsub.f32 1.0, %v1029
      %v1228 = vsub.f32 1.0, %v1044
      %v1229 = vmul.f32 %v1083, %v1227
      %v1230 = vmul.f32 %v1084, %v1228
      %v1231 = vmul.f32 %v1225, %v1029
      %v1232 = vmul.f32 %v1226, %v1044
      %v1233 = vadd.f32 %v1229, %v1231
      %v1234 = vadd.f32 %v1230, %v1232
      %1235 = vst [vmem:[%s244] sm:$0xff] %v1233
      %1236 = vst [vmem:[%s244 + $0x8] sm:$0xff] %v1234
      %p1237 = scmp.lt.s32.totalorder %s16, 1
      %s1238 = scalar_select %p1237, %s16, 1
      %s1239 = smul.addr %s1238, 2
      %s1240 = smul.addr %s1239, 8
      %s1241 = scalar_lea.vmem %s5, %s1240
      // Predicated region
      $region41: #{deconv_gru_cell.1} parent=39 // pred_check
        %p1242 = pneg %p149
      $region42: #{deconv_gru_cell.1} parent=39 // pred_check_branch
        %1244 = sbr.rel (%p1242) target = $region44
      $region43: #{deconv_gru_cell.1} parent=39 // pred_region
        _
      $region44: #{deconv_gru_cell.1} parent=39 // pred_fallthru
        _
    $region40: #{deconv_gru_cell.1} parent=5 // pred_fallthru
      _
    %p1245 = scmp.le.s32.totalorder 2, %s11
    // Predicated region
    $region45: #{deconv_gru_cell.1} parent=5 // pred_check
      %p1246 = pneg %p1245
    $region46: #{deconv_gru_cell.1} parent=5 // pred_check_branch
      %1248 = sbr.rel (%p1246) target = $region48
    $region47: #{deconv_gru_cell.1} parent=5 // pred_region
      %s1249 = ssub.s32 %s11, 2
      // Predicated region
      $region49: #{deconv_gru_cell.1} parent=47 // pred_check
        %p1250 = pneg %p155
      $region50: #{deconv_gru_cell.1} parent=47 // pred_check_branch
        %1252 = sbr.rel (%p1250) target = $region52
      $region51: #{deconv_gru_cell.1} parent=47 // pred_region
        %p1253 = scmp.lt.s32.totalorder %s17, 1
        %s1254 = scalar_select %p1253, %s17, 1
        %s1255 = smul.addr %s1254, 2
        %s1256 = smul.addr %s1255, 8
        %s1257 = scalar_lea.vmem %s5, %s1256
      $region52: #{deconv_gru_cell.1} parent=47 // pred_fallthru
        _
    $region48: #{deconv_gru_cell.1} parent=5 // pred_fallthru
      _
  $region6: #{deconv_gru_cell.1} parent=0 // loop_footer
    %s15 = sadd.s32 1, %s11
  $region7: #{deconv_gru_cell.1} parent=0 // loop_footer_branch
    %10 = sbr.rel target = $region3
  $region8: #{deconv_gru_cell.1} parent=0 // loop_exit
    _

</llo_original>
